<compile_context>
chip_gen: v5e
topology: v5e:2x2
jax: 0.10.0
libtpu: 0.0.40
codegen_flags: <defaults>
</compile_context>

<pallas_src>
import jax
import jax.numpy as jnp
from jax.experimental import pallas as pl
from jax.experimental.pallas import tpu as pltpu


# ----------------------------------------------------------------------------
# Pallas kernel: complex einsum('bixy,ioxy->boxy') over input channels.
# ----------------------------------------------------------------------------
def _spectral_kernel(a_re_ref, a_im_ref, w_re_ref, w_im_ref, o_re_ref, o_im_ref):
    """One (mode_block, batch_tile) grid step.

    a_*_ref : (1, tb, I, S)   real / imag parts of the low-mode spectrum
    w_*_ref : (1, I, O, S)    real / imag parts of the spectral weights
    o_*_ref : (1, tb, O, S)   real / imag parts of the mixed output
    """
    in_ch = w_re_ref.shape[1]

    # Accumulate directly into the VMEM output blocks (bounds live ranges;
    # the blocks are written back to HBM once, after the last store).
    o_re_ref[...] = jnp.zeros_like(o_re_ref)
    o_im_ref[...] = jnp.zeros_like(o_im_ref)

    def mac(i):
        # Ref slices are cheap views; per-channel loads keep vreg pressure low.
        ar = a_re_ref[0, :, i, :][:, None, :]                    # (tb, 1, S)
        ai = a_im_ref[0, :, i, :][:, None, :]
        wr = w_re_ref[0, i][None, :, :].astype(jnp.float32)      # (1, O, S)
        wi = w_im_ref[0, i][None, :, :].astype(jnp.float32)
        o_re_ref[0] += ar * wr - ai * wi
        o_im_ref[0] += ai * wr + ar * wi

    if in_ch <= 8:
        # Small channel counts: full static unroll.
        for i in range(in_ch):
            mac(i)
    else:
        # Larger channel counts: bounded live ranges via fori_loop.
        def body(i, carry):
            mac(i)
            return carry

        jax.lax.fori_loop(0, in_ch, body, 0, unroll=8)


def spectral_complex_matmul(a_re, a_im, w_re, w_im):
    """a_*: (2, B, I, S) f32; w_*: (2, I, O, S) -> (out_re, out_im), each (2, B, O, S) f32."""
    nblk, B, I, S = a_re.shape
    O = w_re.shape[2]
    itemsize = 4

    def block_bytes(tb):
        # Double-buffered a/out blocks plus (double-buffered) weight blocks.
        a_b = 2 * 2 * tb * I * S * itemsize
        o_b = 2 * 2 * tb * O * S * itemsize
        w_b = 2 * 2 * I * O * S * jnp.dtype(w_re.dtype).itemsize
        return a_b + o_b + w_b

    # Largest batch tile that fits a conservative VMEM budget (works under the
    # 16/32 MiB default scoped limits and v7x's 64 MiB physical VMEM).
    budget = 32 << 20
    tb = 1
    for cand in range(1, B + 1):
        if B % cand == 0 and block_bytes(cand) <= budget:
            tb = cand
    nb = B // tb
    # TODO(synk): add grid tiling over O and/or S when even tb=1 exceeds the
    # budget (e.g. I=O>=64 with large mode counts on v7x's 64 MiB VMEM).

    a_spec = pl.BlockSpec((1, tb, I, S), lambda g, b: (g, b, 0, 0))
    # Weight index_map is batch-invariant -> weight block resident across b.
    w_spec = pl.BlockSpec((1, I, O, S), lambda g, b: (g, 0, 0, 0))
    o_spec = pl.BlockSpec((1, tb, O, S), lambda g, b: (g, b, 0, 0))

    flops = 8 * nblk * B * I * O * S
    bytes_accessed = (
        (a_re.size + a_im.size) * itemsize
        + (w_re.size + w_im.size) * jnp.dtype(w_re.dtype).itemsize
        + 2 * nblk * B * O * S * itemsize
    )
    cost = pl.CostEstimate(flops=flops, transcendentals=0,
                           bytes_accessed=bytes_accessed)

    vmem_limit = int(min(64 << 20, max(32 << 20, block_bytes(tb) + (8 << 20))))

    out_re, out_im = pl.pallas_call(
        _spectral_kernel,
        out_shape=(jax.ShapeDtypeStruct((nblk, B, O, S), jnp.float32),
                   jax.ShapeDtypeStruct((nblk, B, O, S), jnp.float32)),
        grid_spec=pltpu.PrefetchScalarGridSpec(
            num_scalar_prefetch=0,
            grid=(nblk, nb),
            in_specs=[a_spec, a_spec, w_spec, w_spec],
            out_specs=[o_spec, o_spec]),
        compiler_params=pltpu.CompilerParams(
            dimension_semantics=("parallel", "parallel"),
            vmem_limit_bytes=vmem_limit),
        cost_estimate=cost,
    )(a_re, a_im, w_re, w_im)
    return out_re, out_im


# ----------------------------------------------------------------------------
# FourierLayer forward (JAX glue around the Pallas kernel).
# ----------------------------------------------------------------------------
def fourier_layer_forward(x, w1, w2, modes1, modes2):
    """
    x : (B, M, N, I) float32 (channels-last, as in the PyTorch forward input)
    w1, w2 : (I, O, modes1, modes2, 2) float32 (real/imag stacked last)
    Requires O == I (the PyTorch module allocates out_ft with I channels).
    """
    B, M, N, I = x.shape
    O = w1.shape[1]
    assert O == I, "FourierLayer requires out_channels == in_channels"
    assert modes2 <= N // 2 + 1 and 2 * modes1 <= M, "modes exceed spectrum size"
    m1, m2 = modes1, modes2
    S = m1 * m2

    # NCHW for the FFT, matching x.permute(0, 3, 1, 2)
    xp = jnp.transpose(x, (0, 3, 1, 2))                       # (B, I, M, N)
    # TODO(synk): rfft2/irfft2 have no Pallas primitive; FFTs run as XLA ops.
    x_ft = jnp.fft.rfft2(xp, s=(M, N), norm="ortho")          # (B, I, M, N//2+1)

    low = x_ft[:, :, :m1, :m2]                                # (B, I, m1, m2)
    high = x_ft[:, :, M - m1:, :m2]                           # (B, I, m1, m2)

    a_re = jnp.stack(
        [low.real.reshape(B, I, S), high.real.reshape(B, I, S)], axis=0)
    a_im = jnp.stack(
        [low.imag.reshape(B, I, S), high.imag.reshape(B, I, S)], axis=0)
    # On v6e/v7x these weight planes can be cast to bf16 to halve the dominant
    # HBM stream (kernel upcasts to f32); kept f32 here since v5e has no bf16 VPU.
    w_re = jnp.stack(
        [w1[..., 0].reshape(I, O, S), w2[..., 0].reshape(I, O, S)], axis=0)
    w_im = jnp.stack(
        [w1[..., 1].reshape(I, O, S), w2[..., 1].reshape(I, O, S)], axis=0)

    out_re, out_im = spectral_complex_matmul(a_re, a_im, w_re, w_im)
    out_re = out_re.reshape(2, B, O, m1, m2)
    out_im = out_im.reshape(2, B, O, m1, m2)

    # TODO(synk): for M,N >> modes, write the kernel output directly into the
    # padded spectrum layout (out BlockSpec / input_output_aliases on a reused
    # zero buffer) to avoid this full-spectrum zero + scatter round trip; here
    # m2 < 128 would make that write lane-narrow, so keep the scatter.
    out_ft = jnp.zeros((B, I, M, N // 2 + 1), dtype=jnp.complex64)
    out_ft = out_ft.at[:, :, :m1, :m2].set(out_re[0] + 1j * out_im[0])
    out_ft = out_ft.at[:, :, M - m1:, :m2].set(out_re[1] + 1j * out_im[1])

    y = jnp.fft.irfft2(out_ft, s=(M, N), norm="ortho")        # (B, I, M, N)
    return jnp.transpose(y, (0, 2, 3, 1))                     # (B, M, N, I)


# Pure-JAX reference (no Pallas) for correctness check.
def fourier_layer_reference(x, w1, w2, modes1, modes2):
    B, M, N, I = x.shape
    m1, m2 = modes1, modes2
    xp = jnp.transpose(x, (0, 3, 1, 2))
    x_ft = jnp.fft.rfft2(xp, s=(M, N), norm="ortho")

    def cmul(a, w):  # a: (B,I,m1,m2) complex, w: (I,O,m1,m2,2)
        wc = w[..., 0] + 1j * w[..., 1]
        return jnp.einsum("bixy,ioxy->boxy", a, wc)

    out_ft = jnp.zeros((B, I, M, N // 2 + 1), dtype=jnp.complex64)
    out_ft = out_ft.at[:, :, :m1, :m2].set(cmul(x_ft[:, :, :m1, :m2], w1))
    out_ft = out_ft.at[:, :, M - m1:, :m2].set(cmul(x_ft[:, :, M - m1:, :m2], w2))
    y = jnp.fft.irfft2(out_ft, s=(M, N), norm="ortho")
    return jnp.transpose(y, (0, 2, 3, 1))


def kaiming_normal_init(key, shape):
    # torch.nn.init.kaiming_normal_(mode='fan_in', nonlinearity='relu') on a
    # tensor (I, O, m1, m2, 2): fan_in = shape[1] * prod(shape[2:]), gain=sqrt(2)
    fan_in = shape[1]
    for d in shape[2:]:
        fan_in *= d
    std = (2.0 / fan_in) ** 0.5
    return std * jax.random.normal(key, shape, dtype=jnp.float32)


if __name__ == "__main__":
    B, M, N = 2, 16, 16
    in_channels = out_channels = 4          # PyTorch code requires I == O
    modes1 = modes2 = 4

    key = jax.random.PRNGKey(0)
    kx, kw1, kw2 = jax.random.split(key, 3)

    x = jax.random.normal(kx, (B, M, N, in_channels), dtype=jnp.float32)
    w1 = kaiming_normal_init(kw1, (in_channels, out_channels, modes1, modes2, 2))
    w2 = kaiming_normal_init(kw2, (in_channels, out_channels, modes1, modes2, 2))

    fwd = jax.jit(fourier_layer_forward, static_argnums=(3, 4))
    y = jax.block_until_ready(fwd(x, w1, w2, modes1, modes2))

    y_ref = jax.block_until_ready(
        fourier_layer_reference(x, w1, w2, modes1, modes2))

    assert y.shape == (B, M, N, out_channels), y.shape
    assert jnp.allclose(y, y_ref, atol=1e-4, rtol=1e-4), "mismatch vs reference"

    print("KERNEL_OK")
</pallas_src>

<mosaic_0001>
module attributes {stable_mosaic.version = 11 : i64} {
  func.func @_spectral_kernel(%arg0: i32, %arg1: i32, %arg2: memref<1x2x4x16xf32, #tpu.memory_space<vmem>>, %arg3: memref<1x2x4x16xf32, #tpu.memory_space<vmem>>, %arg4: memref<1x4x4x16xf32, #tpu.memory_space<vmem>>, %arg5: memref<1x4x4x16xf32, #tpu.memory_space<vmem>>, %arg6: memref<1x2x4x16xf32, #tpu.memory_space<vmem>>, %arg7: memref<1x2x4x16xf32, #tpu.memory_space<vmem>>) attributes {dimension_semantics = [#tpu.dimension_semantics<parallel>, #tpu.dimension_semantics<parallel>], iteration_bounds = array<i64: 2, 1>, scalar_prefetch = 0 : i64, scratch_operands = 0 : i64, tpu.core_type = #tpu.core_type<tc>, window_params = [{transform_indices = @transform_0, window_bounds = array<i64: 1, 2, 4, 16>}, {transform_indices = @transform_1, window_bounds = array<i64: 1, 2, 4, 16>}, {transform_indices = @transform_2, window_bounds = array<i64: 1, 4, 4, 16>}, {transform_indices = @transform_3, window_bounds = array<i64: 1, 4, 4, 16>}, {transform_indices = @transform_4, window_bounds = array<i64: 1, 2, 4, 16>}, {transform_indices = @transform_5, window_bounds = array<i64: 1, 2, 4, 16>}]} {
    %cst = arith.constant 0.000000e+00 : f32
    %0 = vector.broadcast %cst : f32 to vector<1x2x4x16xf32>
    %c0 = arith.constant 0 : index
    %c0_0 = arith.constant 0 : index
    %c0_1 = arith.constant 0 : index
    %c0_2 = arith.constant 0 : index
    %1 = vector.load %arg6[%c0, %c0_0, %c0_1, %c0_2] : memref<1x2x4x16xf32, #tpu.memory_space<vmem>>, vector<1x2x4x16xf32>
    tpu.vector_store %arg6[%c0, %c0_0, %c0_1, %c0_2], %0 {strides = array<i32>} : memref<1x2x4x16xf32, #tpu.memory_space<vmem>>, vector<1x2x4x16xf32>,
    %cst_3 = arith.constant 0.000000e+00 : f32
    %2 = vector.broadcast %cst_3 : f32 to vector<1x2x4x16xf32>
    %c0_4 = arith.constant 0 : index
    %c0_5 = arith.constant 0 : index
    %c0_6 = arith.constant 0 : index
    %c0_7 = arith.constant 0 : index
    %3 = vector.load %arg7[%c0_4, %c0_5, %c0_6, %c0_7] : memref<1x2x4x16xf32, #tpu.memory_space<vmem>>, vector<1x2x4x16xf32>
    tpu.vector_store %arg7[%c0_4, %c0_5, %c0_6, %c0_7], %2 {strides = array<i32>} : memref<1x2x4x16xf32, #tpu.memory_space<vmem>>, vector<1x2x4x16xf32>,
    %c0_8 = arith.constant 0 : index
    %c0_9 = arith.constant 0 : index
    %c0_10 = arith.constant 0 : index
    %c0_11 = arith.constant 0 : index
    %4 = vector.load %arg2[%c0_8, %c0_9, %c0_10, %c0_11] : memref<1x2x4x16xf32, #tpu.memory_space<vmem>>, vector<1x2x1x16xf32>
    %5 = vector.shape_cast %4 : vector<1x2x1x16xf32> to vector<2x16xf32>
    %6 = vector.shape_cast %5 : vector<2x16xf32> to vector<2x1x16xf32>
    %c0_12 = arith.constant 0 : index
    %c0_13 = arith.constant 0 : index
    %c0_14 = arith.constant 0 : index
    %c0_15 = arith.constant 0 : index
    %7 = vector.load %arg3[%c0_12, %c0_13, %c0_14, %c0_15] : memref<1x2x4x16xf32, #tpu.memory_space<vmem>>, vector<1x2x1x16xf32>
    %8 = vector.shape_cast %7 : vector<1x2x1x16xf32> to vector<2x16xf32>
    %9 = vector.shape_cast %8 : vector<2x16xf32> to vector<2x1x16xf32>
    %c0_16 = arith.constant 0 : index
    %c0_17 = arith.constant 0 : index
    %c0_18 = arith.constant 0 : index
    %c0_19 = arith.constant 0 : index
    %10 = vector.load %arg4[%c0_16, %c0_17, %c0_18, %c0_19] : memref<1x4x4x16xf32, #tpu.memory_space<vmem>>, vector<1x1x4x16xf32>
    %11 = vector.shape_cast %10 : vector<1x1x4x16xf32> to vector<4x16xf32>
    %12 = vector.shape_cast %11 : vector<4x16xf32> to vector<1x4x16xf32>
    %c0_20 = arith.constant 0 : index
    %c0_21 = arith.constant 0 : index
    %c0_22 = arith.constant 0 : index
    %c0_23 = arith.constant 0 : index
    %13 = vector.load %arg5[%c0_20, %c0_21, %c0_22, %c0_23] : memref<1x4x4x16xf32, #tpu.memory_space<vmem>>, vector<1x1x4x16xf32>
    %14 = vector.shape_cast %13 : vector<1x1x4x16xf32> to vector<4x16xf32>
    %15 = vector.shape_cast %14 : vector<4x16xf32> to vector<1x4x16xf32>
    %c0_24 = arith.constant 0 : index
    %c0_25 = arith.constant 0 : index
    %c0_26 = arith.constant 0 : index
    %c0_27 = arith.constant 0 : index
    %16 = vector.load %arg6[%c0_24, %c0_25, %c0_26, %c0_27] : memref<1x2x4x16xf32, #tpu.memory_space<vmem>>, vector<1x2x4x16xf32>
    %17 = vector.shape_cast %16 : vector<1x2x4x16xf32> to vector<2x4x16xf32>
    %18 = vector.broadcast %6 : vector<2x1x16xf32> to vector<2x4x16xf32>
    %19 = vector.broadcast %12 : vector<1x4x16xf32> to vector<2x4x16xf32>
    %20 = arith.mulf %18, %19 : vector<2x4x16xf32>
    %21 = vector.broadcast %9 : vector<2x1x16xf32> to vector<2x4x16xf32>
    %22 = vector.broadcast %15 : vector<1x4x16xf32> to vector<2x4x16xf32>
    %23 = arith.mulf %21, %22 : vector<2x4x16xf32>
    %24 = arith.subf %20, %23 : vector<2x4x16xf32>
    %25 = arith.addf %17, %24 : vector<2x4x16xf32>
    %c0_28 = arith.constant 0 : index
    %c0_29 = arith.constant 0 : index
    %c0_30 = arith.constant 0 : index
    %c0_31 = arith.constant 0 : index
    %26 = vector.load %arg6[%c0_28, %c0_29, %c0_30, %c0_31] : memref<1x2x4x16xf32, #tpu.memory_space<vmem>>, vector<1x2x4x16xf32>
    %27 = vector.shape_cast %26 : vector<1x2x4x16xf32> to vector<2x4x16xf32>
    %28 = vector.shape_cast %25 : vector<2x4x16xf32> to vector<1x2x4x16xf32>
    tpu.vector_store %arg6[%c0_28, %c0_29, %c0_30, %c0_31], %28 {strides = array<i32>} : memref<1x2x4x16xf32, #tpu.memory_space<vmem>>, vector<1x2x4x16xf32>,
    %c0_32 = arith.constant 0 : index
    %c0_33 = arith.constant 0 : index
    %c0_34 = arith.constant 0 : index
    %c0_35 = arith.constant 0 : index
    %29 = vector.load %arg7[%c0_32, %c0_33, %c0_34, %c0_35] : memref<1x2x4x16xf32, #tpu.memory_space<vmem>>, vector<1x2x4x16xf32>
    %30 = vector.shape_cast %29 : vector<1x2x4x16xf32> to vector<2x4x16xf32>
    %31 = vector.broadcast %9 : vector<2x1x16xf32> to vector<2x4x16xf32>
    %32 = vector.broadcast %12 : vector<1x4x16xf32> to vector<2x4x16xf32>
    %33 = arith.mulf %31, %32 : vector<2x4x16xf32>
    %34 = vector.broadcast %6 : vector<2x1x16xf32> to vector<2x4x16xf32>
    %35 = vector.broadcast %15 : vector<1x4x16xf32> to vector<2x4x16xf32>
    %36 = arith.mulf %34, %35 : vector<2x4x16xf32>
    %37 = arith.addf %33, %36 : vector<2x4x16xf32>
    %38 = arith.addf %30, %37 : vector<2x4x16xf32>
    %c0_36 = arith.constant 0 : index
    %c0_37 = arith.constant 0 : index
    %c0_38 = arith.constant 0 : index
    %c0_39 = arith.constant 0 : index
    %39 = vector.load %arg7[%c0_36, %c0_37, %c0_38, %c0_39] : memref<1x2x4x16xf32, #tpu.memory_space<vmem>>, vector<1x2x4x16xf32>
    %40 = vector.shape_cast %39 : vector<1x2x4x16xf32> to vector<2x4x16xf32>
    %41 = vector.shape_cast %38 : vector<2x4x16xf32> to vector<1x2x4x16xf32>
    tpu.vector_store %arg7[%c0_36, %c0_37, %c0_38, %c0_39], %41 {strides = array<i32>} : memref<1x2x4x16xf32, #tpu.memory_space<vmem>>, vector<1x2x4x16xf32>,
    %c0_40 = arith.constant 0 : index
    %c0_41 = arith.constant 0 : index
    %c1 = arith.constant 1 : index
    %c0_42 = arith.constant 0 : index
    %42 = vector.load %arg2[%c0_40, %c0_41, %c1, %c0_42] : memref<1x2x4x16xf32, #tpu.memory_space<vmem>>, vector<1x2x1x16xf32>
    %43 = vector.shape_cast %42 : vector<1x2x1x16xf32> to vector<2x16xf32>
    %44 = vector.shape_cast %43 : vector<2x16xf32> to vector<2x1x16xf32>
    %c0_43 = arith.constant 0 : index
    %c0_44 = arith.constant 0 : index
    %c1_45 = arith.constant 1 : index
    %c0_46 = arith.constant 0 : index
    %45 = vector.load %arg3[%c0_43, %c0_44, %c1_45, %c0_46] : memref<1x2x4x16xf32, #tpu.memory_space<vmem>>, vector<1x2x1x16xf32>
    %46 = vector.shape_cast %45 : vector<1x2x1x16xf32> to vector<2x16xf32>
    %47 = vector.shape_cast %46 : vector<2x16xf32> to vector<2x1x16xf32>
    %c0_47 = arith.constant 0 : index
    %c1_48 = arith.constant 1 : index
    %c0_49 = arith.constant 0 : index
    %c0_50 = arith.constant 0 : index
    %48 = vector.load %arg4[%c0_47, %c1_48, %c0_49, %c0_50] : memref<1x4x4x16xf32, #tpu.memory_space<vmem>>, vector<1x1x4x16xf32>
    %49 = vector.shape_cast %48 : vector<1x1x4x16xf32> to vector<4x16xf32>
    %50 = vector.shape_cast %49 : vector<4x16xf32> to vector<1x4x16xf32>
    %c0_51 = arith.constant 0 : index
    %c1_52 = arith.constant 1 : index
    %c0_53 = arith.constant 0 : index
    %c0_54 = arith.constant 0 : index
    %51 = vector.load %arg5[%c0_51, %c1_52, %c0_53, %c0_54] : memref<1x4x4x16xf32, #tpu.memory_space<vmem>>, vector<1x1x4x16xf32>
    %52 = vector.shape_cast %51 : vector<1x1x4x16xf32> to vector<4x16xf32>
    %53 = vector.shape_cast %52 : vector<4x16xf32> to vector<1x4x16xf32>
    %c0_55 = arith.constant 0 : index
    %c0_56 = arith.constant 0 : index
    %c0_57 = arith.constant 0 : index
    %c0_58 = arith.constant 0 : index
    %54 = vector.load %arg6[%c0_55, %c0_56, %c0_57, %c0_58] : memref<1x2x4x16xf32, #tpu.memory_space<vmem>>, vector<1x2x4x16xf32>
    %55 = vector.shape_cast %54 : vector<1x2x4x16xf32> to vector<2x4x16xf32>
    %56 = vector.broadcast %44 : vector<2x1x16xf32> to vector<2x4x16xf32>
    %57 = vector.broadcast %50 : vector<1x4x16xf32> to vector<2x4x16xf32>
    %58 = arith.mulf %56, %57 : vector<2x4x16xf32>
    %59 = vector.broadcast %47 : vector<2x1x16xf32> to vector<2x4x16xf32>
    %60 = vector.broadcast %53 : vector<1x4x16xf32> to vector<2x4x16xf32>
    %61 = arith.mulf %59, %60 : vector<2x4x16xf32>
    %62 = arith.subf %58, %61 : vector<2x4x16xf32>
    %63 = arith.addf %55, %62 : vector<2x4x16xf32>
    %c0_59 = arith.constant 0 : index
    %c0_60 = arith.constant 0 : index
    %c0_61 = arith.constant 0 : index
    %c0_62 = arith.constant 0 : index
    %64 = vector.load %arg6[%c0_59, %c0_60, %c0_61, %c0_62] : memref<1x2x4x16xf32, #tpu.memory_space<vmem>>, vector<1x2x4x16xf32>
    %65 = vector.shape_cast %64 : vector<1x2x4x16xf32> to vector<2x4x16xf32>
    %66 = vector.shape_cast %63 : vector<2x4x16xf32> to vector<1x2x4x16xf32>
    tpu.vector_store %arg6[%c0_59, %c0_60, %c0_61, %c0_62], %66 {strides = array<i32>} : memref<1x2x4x16xf32, #tpu.memory_space<vmem>>, vector<1x2x4x16xf32>,
    %c0_63 = arith.constant 0 : index
    %c0_64 = arith.constant 0 : index
    %c0_65 = arith.constant 0 : index
    %c0_66 = arith.constant 0 : index
    %67 = vector.load %arg7[%c0_63, %c0_64, %c0_65, %c0_66] : memref<1x2x4x16xf32, #tpu.memory_space<vmem>>, vector<1x2x4x16xf32>
    %68 = vector.shape_cast %67 : vector<1x2x4x16xf32> to vector<2x4x16xf32>
    %69 = vector.broadcast %47 : vector<2x1x16xf32> to vector<2x4x16xf32>
    %70 = vector.broadcast %50 : vector<1x4x16xf32> to vector<2x4x16xf32>
    %71 = arith.mulf %69, %70 : vector<2x4x16xf32>
    %72 = vector.broadcast %44 : vector<2x1x16xf32> to vector<2x4x16xf32>
    %73 = vector.broadcast %53 : vector<1x4x16xf32> to vector<2x4x16xf32>
    %74 = arith.mulf %72, %73 : vector<2x4x16xf32>
    %75 = arith.addf %71, %74 : vector<2x4x16xf32>
    %76 = arith.addf %68, %75 : vector<2x4x16xf32>
    %c0_67 = arith.constant 0 : index
    %c0_68 = arith.constant 0 : index
    %c0_69 = arith.constant 0 : index
    %c0_70 = arith.constant 0 : index
    %77 = vector.load %arg7[%c0_67, %c0_68, %c0_69, %c0_70] : memref<1x2x4x16xf32, #tpu.memory_space<vmem>>, vector<1x2x4x16xf32>
    %78 = vector.shape_cast %77 : vector<1x2x4x16xf32> to vector<2x4x16xf32>
    %79 = vector.shape_cast %76 : vector<2x4x16xf32> to vector<1x2x4x16xf32>
    tpu.vector_store %arg7[%c0_67, %c0_68, %c0_69, %c0_70], %79 {strides = array<i32>} : memref<1x2x4x16xf32, #tpu.memory_space<vmem>>, vector<1x2x4x16xf32>,
    %c0_71 = arith.constant 0 : index
    %c0_72 = arith.constant 0 : index
    %c2 = arith.constant 2 : index
    %c0_73 = arith.constant 0 : index
    %80 = vector.load %arg2[%c0_71, %c0_72, %c2, %c0_73] : memref<1x2x4x16xf32, #tpu.memory_space<vmem>>, vector<1x2x1x16xf32>
    %81 = vector.shape_cast %80 : vector<1x2x1x16xf32> to vector<2x16xf32>
    %82 = vector.shape_cast %81 : vector<2x16xf32> to vector<2x1x16xf32>
    %c0_74 = arith.constant 0 : index
    %c0_75 = arith.constant 0 : index
    %c2_76 = arith.constant 2 : index
    %c0_77 = arith.constant 0 : index
    %83 = vector.load %arg3[%c0_74, %c0_75, %c2_76, %c0_77] : memref<1x2x4x16xf32, #tpu.memory_space<vmem>>, vector<1x2x1x16xf32>
    %84 = vector.shape_cast %83 : vector<1x2x1x16xf32> to vector<2x16xf32>
    %85 = vector.shape_cast %84 : vector<2x16xf32> to vector<2x1x16xf32>
    %c0_78 = arith.constant 0 : index
    %c2_79 = arith.constant 2 : index
    %c0_80 = arith.constant 0 : index
    %c0_81 = arith.constant 0 : index
    %86 = vector.load %arg4[%c0_78, %c2_79, %c0_80, %c0_81] : memref<1x4x4x16xf32, #tpu.memory_space<vmem>>, vector<1x1x4x16xf32>
    %87 = vector.shape_cast %86 : vector<1x1x4x16xf32> to vector<4x16xf32>
    %88 = vector.shape_cast %87 : vector<4x16xf32> to vector<1x4x16xf32>
    %c0_82 = arith.constant 0 : index
    %c2_83 = arith.constant 2 : index
    %c0_84 = arith.constant 0 : index
    %c0_85 = arith.constant 0 : index
    %89 = vector.load %arg5[%c0_82, %c2_83, %c0_84, %c0_85] : memref<1x4x4x16xf32, #tpu.memory_space<vmem>>, vector<1x1x4x16xf32>
    %90 = vector.shape_cast %89 : vector<1x1x4x16xf32> to vector<4x16xf32>
    %91 = vector.shape_cast %90 : vector<4x16xf32> to vector<1x4x16xf32>
    %c0_86 = arith.constant 0 : index
    %c0_87 = arith.constant 0 : index
    %c0_88 = arith.constant 0 : index
    %c0_89 = arith.constant 0 : index
    %92 = vector.load %arg6[%c0_86, %c0_87, %c0_88, %c0_89] : memref<1x2x4x16xf32, #tpu.memory_space<vmem>>, vector<1x2x4x16xf32>
    %93 = vector.shape_cast %92 : vector<1x2x4x16xf32> to vector<2x4x16xf32>
    %94 = vector.broadcast %82 : vector<2x1x16xf32> to vector<2x4x16xf32>
    %95 = vector.broadcast %88 : vector<1x4x16xf32> to vector<2x4x16xf32>
    %96 = arith.mulf %94, %95 : vector<2x4x16xf32>
    %97 = vector.broadcast %85 : vector<2x1x16xf32> to vector<2x4x16xf32>
    %98 = vector.broadcast %91 : vector<1x4x16xf32> to vector<2x4x16xf32>
    %99 = arith.mulf %97, %98 : vector<2x4x16xf32>
    %100 = arith.subf %96, %99 : vector<2x4x16xf32>
    %101 = arith.addf %93, %100 : vector<2x4x16xf32>
    %c0_90 = arith.constant 0 : index
    %c0_91 = arith.constant 0 : index
    %c0_92 = arith.constant 0 : index
    %c0_93 = arith.constant 0 : index
    %102 = vector.load %arg6[%c0_90, %c0_91, %c0_92, %c0_93] : memref<1x2x4x16xf32, #tpu.memory_space<vmem>>, vector<1x2x4x16xf32>
    %103 = vector.shape_cast %102 : vector<1x2x4x16xf32> to vector<2x4x16xf32>
    %104 = vector.shape_cast %101 : vector<2x4x16xf32> to vector<1x2x4x16xf32>
    tpu.vector_store %arg6[%c0_90, %c0_91, %c0_92, %c0_93], %104 {strides = array<i32>} : memref<1x2x4x16xf32, #tpu.memory_space<vmem>>, vector<1x2x4x16xf32>,
    %c0_94 = arith.constant 0 : index
    %c0_95 = arith.constant 0 : index
    %c0_96 = arith.constant 0 : index
    %c0_97 = arith.constant 0 : index
    %105 = vector.load %arg7[%c0_94, %c0_95, %c0_96, %c0_97] : memref<1x2x4x16xf32, #tpu.memory_space<vmem>>, vector<1x2x4x16xf32>
    %106 = vector.shape_cast %105 : vector<1x2x4x16xf32> to vector<2x4x16xf32>
    %107 = vector.broadcast %85 : vector<2x1x16xf32> to vector<2x4x16xf32>
    %108 = vector.broadcast %88 : vector<1x4x16xf32> to vector<2x4x16xf32>
    %109 = arith.mulf %107, %108 : vector<2x4x16xf32>
    %110 = vector.broadcast %82 : vector<2x1x16xf32> to vector<2x4x16xf32>
    %111 = vector.broadcast %91 : vector<1x4x16xf32> to vector<2x4x16xf32>
    %112 = arith.mulf %110, %111 : vector<2x4x16xf32>
    %113 = arith.addf %109, %112 : vector<2x4x16xf32>
    %114 = arith.addf %106, %113 : vector<2x4x16xf32>
    %c0_98 = arith.constant 0 : index
    %c0_99 = arith.constant 0 : index
    %c0_100 = arith.constant 0 : index
    %c0_101 = arith.constant 0 : index
    %115 = vector.load %arg7[%c0_98, %c0_99, %c0_100, %c0_101] : memref<1x2x4x16xf32, #tpu.memory_space<vmem>>, vector<1x2x4x16xf32>
    %116 = vector.shape_cast %115 : vector<1x2x4x16xf32> to vector<2x4x16xf32>
    %117 = vector.shape_cast %114 : vector<2x4x16xf32> to vector<1x2x4x16xf32>
    tpu.vector_store %arg7[%c0_98, %c0_99, %c0_100, %c0_101], %117 {strides = array<i32>} : memref<1x2x4x16xf32, #tpu.memory_space<vmem>>, vector<1x2x4x16xf32>,
    %c0_102 = arith.constant 0 : index
    %c0_103 = arith.constant 0 : index
    %c3 = arith.constant 3 : index
    %c0_104 = arith.constant 0 : index
    %118 = vector.load %arg2[%c0_102, %c0_103, %c3, %c0_104] : memref<1x2x4x16xf32, #tpu.memory_space<vmem>>, vector<1x2x1x16xf32>
    %119 = vector.shape_cast %118 : vector<1x2x1x16xf32> to vector<2x16xf32>
    %120 = vector.shape_cast %119 : vector<2x16xf32> to vector<2x1x16xf32>
    %c0_105 = arith.constant 0 : index
    %c0_106 = arith.constant 0 : index
    %c3_107 = arith.constant 3 : index
    %c0_108 = arith.constant 0 : index
    %121 = vector.load %arg3[%c0_105, %c0_106, %c3_107, %c0_108] : memref<1x2x4x16xf32, #tpu.memory_space<vmem>>, vector<1x2x1x16xf32>
    %122 = vector.shape_cast %121 : vector<1x2x1x16xf32> to vector<2x16xf32>
    %123 = vector.shape_cast %122 : vector<2x16xf32> to vector<2x1x16xf32>
    %c0_109 = arith.constant 0 : index
    %c3_110 = arith.constant 3 : index
    %c0_111 = arith.constant 0 : index
    %c0_112 = arith.constant 0 : index
    %124 = vector.load %arg4[%c0_109, %c3_110, %c0_111, %c0_112] : memref<1x4x4x16xf32, #tpu.memory_space<vmem>>, vector<1x1x4x16xf32>
    %125 = vector.shape_cast %124 : vector<1x1x4x16xf32> to vector<4x16xf32>
    %126 = vector.shape_cast %125 : vector<4x16xf32> to vector<1x4x16xf32>
    %c0_113 = arith.constant 0 : index
    %c3_114 = arith.constant 3 : index
    %c0_115 = arith.constant 0 : index
    %c0_116 = arith.constant 0 : index
    %127 = vector.load %arg5[%c0_113, %c3_114, %c0_115, %c0_116] : memref<1x4x4x16xf32, #tpu.memory_space<vmem>>, vector<1x1x4x16xf32>
    %128 = vector.shape_cast %127 : vector<1x1x4x16xf32> to vector<4x16xf32>
    %129 = vector.shape_cast %128 : vector<4x16xf32> to vector<1x4x16xf32>
    %c0_117 = arith.constant 0 : index
    %c0_118 = arith.constant 0 : index
    %c0_119 = arith.constant 0 : index
    %c0_120 = arith.constant 0 : index
    %130 = vector.load %arg6[%c0_117, %c0_118, %c0_119, %c0_120] : memref<1x2x4x16xf32, #tpu.memory_space<vmem>>, vector<1x2x4x16xf32>
    %131 = vector.shape_cast %130 : vector<1x2x4x16xf32> to vector<2x4x16xf32>
    %132 = vector.broadcast %120 : vector<2x1x16xf32> to vector<2x4x16xf32>
    %133 = vector.broadcast %126 : vector<1x4x16xf32> to vector<2x4x16xf32>
    %134 = arith.mulf %132, %133 : vector<2x4x16xf32>
    %135 = vector.broadcast %123 : vector<2x1x16xf32> to vector<2x4x16xf32>
    %136 = vector.broadcast %129 : vector<1x4x16xf32> to vector<2x4x16xf32>
    %137 = arith.mulf %135, %136 : vector<2x4x16xf32>
    %138 = arith.subf %134, %137 : vector<2x4x16xf32>
    %139 = arith.addf %131, %138 : vector<2x4x16xf32>
    %c0_121 = arith.constant 0 : index
    %c0_122 = arith.constant 0 : index
    %c0_123 = arith.constant 0 : index
    %c0_124 = arith.constant 0 : index
    %140 = vector.load %arg6[%c0_121, %c0_122, %c0_123, %c0_124] : memref<1x2x4x16xf32, #tpu.memory_space<vmem>>, vector<1x2x4x16xf32>
    %141 = vector.shape_cast %140 : vector<1x2x4x16xf32> to vector<2x4x16xf32>
    %142 = vector.shape_cast %139 : vector<2x4x16xf32> to vector<1x2x4x16xf32>
    tpu.vector_store %arg6[%c0_121, %c0_122, %c0_123, %c0_124], %142 {strides = array<i32>} : memref<1x2x4x16xf32, #tpu.memory_space<vmem>>, vector<1x2x4x16xf32>,
    %c0_125 = arith.constant 0 : index
    %c0_126 = arith.constant 0 : index
    %c0_127 = arith.constant 0 : index
    %c0_128 = arith.constant 0 : index
    %143 = vector.load %arg7[%c0_125, %c0_126, %c0_127, %c0_128] : memref<1x2x4x16xf32, #tpu.memory_space<vmem>>, vector<1x2x4x16xf32>
    %144 = vector.shape_cast %143 : vector<1x2x4x16xf32> to vector<2x4x16xf32>
    %145 = vector.broadcast %123 : vector<2x1x16xf32> to vector<2x4x16xf32>
    %146 = vector.broadcast %126 : vector<1x4x16xf32> to vector<2x4x16xf32>
    %147 = arith.mulf %145, %146 : vector<2x4x16xf32>
    %148 = vector.broadcast %120 : vector<2x1x16xf32> to vector<2x4x16xf32>
    %149 = vector.broadcast %129 : vector<1x4x16xf32> to vector<2x4x16xf32>
    %150 = arith.mulf %148, %149 : vector<2x4x16xf32>
    %151 = arith.addf %147, %150 : vector<2x4x16xf32>
    %152 = arith.addf %144, %151 : vector<2x4x16xf32>
    %c0_129 = arith.constant 0 : index
    %c0_130 = arith.constant 0 : index
    %c0_131 = arith.constant 0 : index
    %c0_132 = arith.constant 0 : index
    %153 = vector.load %arg7[%c0_129, %c0_130, %c0_131, %c0_132] : memref<1x2x4x16xf32, #tpu.memory_space<vmem>>, vector<1x2x4x16xf32>
    %154 = vector.shape_cast %153 : vector<1x2x4x16xf32> to vector<2x4x16xf32>
    %155 = vector.shape_cast %152 : vector<2x4x16xf32> to vector<1x2x4x16xf32>
    tpu.vector_store %arg7[%c0_129, %c0_130, %c0_131, %c0_132], %155 {strides = array<i32>} : memref<1x2x4x16xf32, #tpu.memory_space<vmem>>, vector<1x2x4x16xf32>,
    return
  }
  func.func @transform_0(%arg0: i32, %arg1: i32) -> (i32, i32, i32, i32) {
    %c0_i32 = arith.constant 0 : i32
    %c0_i32_0 = arith.constant 0 : i32
    %c0_i32_1 = arith.constant 0 : i32
    return %arg0, %arg1, %c0_i32, %c0_i32_0 : i32, i32, i32, i32
  }
  func.func @transform_1(%arg0: i32, %arg1: i32) -> (i32, i32, i32, i32) {
    %c0_i32 = arith.constant 0 : i32
    %c0_i32_0 = arith.constant 0 : i32
    %c0_i32_1 = arith.constant 0 : i32
    return %arg0, %arg1, %c0_i32, %c0_i32_0 : i32, i32, i32, i32
  }
  func.func @transform_2(%arg0: i32, %arg1: i32) -> (i32, i32, i32, i32) {
    %c0_i32 = arith.constant 0 : i32
    %c0_i32_0 = arith.constant 0 : i32
    %c0_i32_1 = arith.constant 0 : i32
    %c0_i32_2 = arith.constant 0 : i32
    return %arg0, %c0_i32, %c0_i32_0, %c0_i32_1 : i32, i32, i32, i32
  }
  func.func @transform_3(%arg0: i32, %arg1: i32) -> (i32, i32, i32, i32) {
    %c0_i32 = arith.constant 0 : i32
    %c0_i32_0 = arith.constant 0 : i32
    %c0_i32_1 = arith.constant 0 : i32
    %c0_i32_2 = arith.constant 0 : i32
    return %arg0, %c0_i32, %c0_i32_0, %c0_i32_1 : i32, i32, i32, i32
  }
  func.func @transform_4(%arg0: i32, %arg1: i32) -> (i32, i32, i32, i32) {
    %c0_i32 = arith.constant 0 : i32
    %c0_i32_0 = arith.constant 0 : i32
    %c0_i32_1 = arith.constant 0 : i32
    return %arg0, %arg1, %c0_i32, %c0_i32_0 : i32, i32, i32, i32
  }
  func.func @transform_5(%arg0: i32, %arg1: i32) -> (i32, i32, i32, i32) {
    %c0_i32 = arith.constant 0 : i32
    %c0_i32_0 = arith.constant 0 : i32
    %c0_i32_1 = arith.constant 0 : i32
    return %arg0, %arg1, %c0_i32, %c0_i32_0 : i32, i32, i32, i32
  }
}

</mosaic_0001>

<llo_original>
// kernel: squeeze.10
$region0: #{squeeze.10}
  %s0 = inlined_call_operand.vmem [shape: f32[4,4,4,4], index: 0, kind: input, shape index: {}]
  %s1 = inlined_call_operand.vmem [shape: f32[1,4,4,16], index: 1, kind: output, shape index: {}]
  $region1: #{squeeze.10} parent=0
    #allocation0 [shape = 'u8[16384]{0}', space=vmem, size = 0x4000, scoped, tag = 'scoped mem for output reshape']
    #allocation1 [shape = 'u8[65536]{0}', space=vmem, size = 0x10000, scoped, tag = 'scoped mem for input reshape']
    %s3 = ssub.s32 16, 1
    %s4 = scalar_lea.vmem %s0, 60
    %v5 = vld [vmem:[%s4] sm:%s3]
    %s6 = scalar_lea.vmem [#allocation1], 120
    %7 = vst [vmem:[%s6] sm:%s3] %v5
    %s8 = scalar_lea.vmem %s0, 56
    %v9 = vld [vmem:[%s8] sm:%s3]
    %s10 = scalar_lea.vmem [#allocation1], 112
    %11 = vst [vmem:[%s10] sm:%s3] %v9
    %s12 = scalar_lea.vmem %s0, 52
    %v13 = vld [vmem:[%s12] sm:%s3]
    %s14 = scalar_lea.vmem [#allocation1], 104
    %15 = vst [vmem:[%s14] sm:%s3] %v13
    %s16 = scalar_lea.vmem %s0, 48
    %v17 = vld [vmem:[%s16] sm:%s3]
    %s18 = scalar_lea.vmem [#allocation1], 96
    %19 = vst [vmem:[%s18] sm:%s3] %v17
    %s20 = scalar_lea.vmem %s0, 44
    %v21 = vld [vmem:[%s20] sm:%s3]
    %s22 = scalar_lea.vmem [#allocation1], 88
    %23 = vst [vmem:[%s22] sm:%s3] %v21
    %s24 = scalar_lea.vmem %s0, 40
    %v25 = vld [vmem:[%s24] sm:%s3]
    %s26 = scalar_lea.vmem [#allocation1], 80
    %27 = vst [vmem:[%s26] sm:%s3] %v25
    %s28 = scalar_lea.vmem %s0, 36
    %v29 = vld [vmem:[%s28] sm:%s3]
    %s30 = scalar_lea.vmem [#allocation1], 72
    %31 = vst [vmem:[%s30] sm:%s3] %v29
    %s32 = scalar_lea.vmem %s0, 32
    %v33 = vld [vmem:[%s32] sm:%s3]
    %s34 = scalar_lea.vmem [#allocation1], 64
    %35 = vst [vmem:[%s34] sm:%s3] %v33
    %s36 = scalar_lea.vmem %s0, 28
    %v37 = vld [vmem:[%s36] sm:%s3]
    %s38 = scalar_lea.vmem [#allocation1], 56
    %39 = vst [vmem:[%s38] sm:%s3] %v37
    %s40 = scalar_lea.vmem %s0, 24
    %v41 = vld [vmem:[%s40] sm:%s3]
    %s42 = scalar_lea.vmem [#allocation1], 48
    %43 = vst [vmem:[%s42] sm:%s3] %v41
    %s44 = scalar_lea.vmem %s0, 20
    %v45 = vld [vmem:[%s44] sm:%s3]
    %s46 = scalar_lea.vmem [#allocation1], 40
    %47 = vst [vmem:[%s46] sm:%s3] %v45
    %s48 = scalar_lea.vmem %s0, 16
    %v49 = vld [vmem:[%s48] sm:%s3]
    %s50 = scalar_lea.vmem [#allocation1], 32
    %51 = vst [vmem:[%s50] sm:%s3] %v49
    %s52 = scalar_lea.vmem %s0, 12
    %v53 = vld [vmem:[%s52] sm:%s3]
    %s54 = scalar_lea.vmem [#allocation1], 24
    %55 = vst [vmem:[%s54] sm:%s3] %v53
    %s56 = scalar_lea.vmem %s0, 8
    %v57 = vld [vmem:[%s56] sm:%s3]
    %s58 = scalar_lea.vmem [#allocation1], 16
    %59 = vst [vmem:[%s58] sm:%s3] %v57
    %s60 = scalar_lea.vmem %s0, 4
    %v61 = vld [vmem:[%s60] sm:%s3]
    %s62 = scalar_lea.vmem [#allocation1], 8
    %63 = vst [vmem:[%s62] sm:%s3] %v61
    %v64 = vld [vmem:[%s0] sm:%s3]
    %65 = vst [vmem:[#allocation1] sm:%s3] %v64
    %v66 = vld [vmem:[#allocation1] ss:$8 sm:$0xf]
    %v67 = vld [vmem:[#allocation1] ss:$8 sm:$0xf0]
    %vm68 = vcmask 1047556
    %v69 = vsel %vm68, %v67, %v66
    %vm70 = vcmask 31744
    %71 = vst.msk [vmem:[#allocation0] sm:$0xf] %vm70, %v69
    %s72 = scalar_lea.vmem [#allocation0], 4
    %73 = vst.msk [vmem:[%s72] sm:$0xf0] %vm70, %v69
    %s74 = scalar_lea.vmem [#allocation1], 64
    %v75 = vld [vmem:[%s74] ss:$8 sm:$0xf]
    %s76 = scalar_lea.vmem [#allocation1], 64
    %v77 = vld [vmem:[%s76] ss:$8 sm:$0xf0]
    %vm78 = vcmask 1047556
    %v79 = vsel %vm78, %v77, %v75
    %vm80 = vcmask 31744
    %s81 = scalar_lea.vmem [#allocation0], 16
    %82 = vst.msk [vmem:[%s81] sm:$0xf] %vm80, %v79
    %s83 = scalar_lea.vmem [#allocation0], 20
    %84 = vst.msk [vmem:[%s83] sm:$0xf0] %vm80, %v79
    %s85 = scalar_lea.vmem [#allocation1], 3
    %v86 = vld [vmem:[%s85] ss:$8 sm:$0xf]
    %s87 = scalar_lea.vmem [#allocation1], 3
    %v88 = vld [vmem:[%s87] ss:$8 sm:$0xf0]
    %vm89 = vcmask 1047556
    %v90 = vsel %vm89, %v88, %v86
    %91 = vrot.lane.b32.xlu0 %v90, 12
    %v92 = vpop.permute.xlu0 %91
    %vm93 = vcmask 130144
    %94 = vst.msk [vmem:[#allocation0] sm:$0xf] %vm93, %v92
    %s95 = scalar_lea.vmem [#allocation0], 4
    %96 = vst.msk [vmem:[%s95] sm:$0xf0] %vm93, %v92
    %s97 = scalar_lea.vmem [#allocation1], 67
    %v98 = vld [vmem:[%s97] ss:$8 sm:$0xf]
    %s99 = scalar_lea.vmem [#allocation1], 67
    %v100 = vld [vmem:[%s99] ss:$8 sm:$0xf0]
    %vm101 = vcmask 1047556
    %v102 = vsel %vm101, %v100, %v98
    %103 = vrot.lane.b32.xlu0 %v102, 12
    %v104 = vpop.permute.xlu0 %103
    %vm105 = vcmask 130144
    %s106 = scalar_lea.vmem [#allocation0], 16
    %107 = vst.msk [vmem:[%s106] sm:$0xf] %vm105, %v104
    %s108 = scalar_lea.vmem [#allocation0], 20
    %109 = vst.msk [vmem:[%s108] sm:$0xf0] %vm105, %v104
    %s110 = scalar_lea.vmem [#allocation1], 2
    %v111 = vld [vmem:[%s110] ss:$8 sm:$0xf]
    %s112 = scalar_lea.vmem [#allocation1], 2
    %v113 = vld [vmem:[%s112] ss:$8 sm:$0xf0]
    %vm114 = vcmask 1047556
    %v115 = vsel %vm114, %v113, %v111
    %116 = vrot.lane.b32.xlu0 %v115, 8
    %v117 = vpop.permute.xlu0 %116
    %vm118 = vcmask 97344
    %119 = vst.msk [vmem:[#allocation0] sm:$0xf] %vm118, %v117
    %s120 = scalar_lea.vmem [#allocation0], 4
    %121 = vst.msk [vmem:[%s120] sm:$0xf0] %vm118, %v117
    %s122 = scalar_lea.vmem [#allocation1], 66
    %v123 = vld [vmem:[%s122] ss:$8 sm:$0xf]
    %s124 = scalar_lea.vmem [#allocation1], 66
    %v125 = vld [vmem:[%s124] ss:$8 sm:$0xf0]
    %vm126 = vcmask 1047556
    %v127 = vsel %vm126, %v125, %v123
    %128 = vrot.lane.b32.xlu0 %v127, 8
    %v129 = vpop.permute.xlu0 %128
    %vm130 = vcmask 97344
    %s131 = scalar_lea.vmem [#allocation0], 16
    %132 = vst.msk [vmem:[%s131] sm:$0xf] %vm130, %v129
    %s133 = scalar_lea.vmem [#allocation0], 20
    %134 = vst.msk [vmem:[%s133] sm:$0xf0] %vm130, %v129
    %s135 = scalar_lea.vmem [#allocation1], 1
    %v136 = vld [vmem:[%s135] ss:$8 sm:$0xf]
    %s137 = scalar_lea.vmem [#allocation1], 1
    %v138 = vld [vmem:[%s137] ss:$8 sm:$0xf0]
    %vm139 = vcmask 1047556
    %v140 = vsel %vm139, %v138, %v136
    %141 = vrot.lane.b32.xlu0 %v140, 4
    %v142 = vpop.permute.xlu0 %141
    %vm143 = vcmask 64544
    %144 = vst.msk [vmem:[#allocation0] sm:$0xf] %vm143, %v142
    %s145 = scalar_lea.vmem [#allocation0], 4
    %146 = vst.msk [vmem:[%s145] sm:$0xf0] %vm143, %v142
    %s147 = scalar_lea.vmem [#allocation1], 65
    %v148 = vld [vmem:[%s147] ss:$8 sm:$0xf]
    %s149 = scalar_lea.vmem [#allocation1], 65
    %v150 = vld [vmem:[%s149] ss:$8 sm:$0xf0]
    %vm151 = vcmask 1047556
    %v152 = vsel %vm151, %v150, %v148
    %153 = vrot.lane.b32.xlu0 %v152, 4
    %v154 = vpop.permute.xlu0 %153
    %vm155 = vcmask 64544
    %s156 = scalar_lea.vmem [#allocation0], 16
    %157 = vst.msk [vmem:[%s156] sm:$0xf] %vm155, %v154
    %s158 = scalar_lea.vmem [#allocation0], 20
    %159 = vst.msk [vmem:[%s158] sm:$0xf0] %vm155, %v154
    %s161 = ssub.s32 16, 1
    %v162 = vld [vmem:[#allocation0] sm:%s161]
    %s164 = ssub.s32 16, 1
    %165 = vst [vmem:[%s1] sm:%s164] %v162
    %s166 = scalar_lea.vmem [#allocation0], 8
    %v167 = vld [vmem:[%s166] sm:%s161]
    %s169 = ssub.s32 16, 1
    %s170 = scalar_lea.vmem %s1, 4
    %171 = vst [vmem:[%s170] sm:%s169] %v167
    %s172 = scalar_lea.vmem [#allocation0], 16
    %v173 = vld [vmem:[%s172] sm:%s161]
    %s175 = ssub.s32 16, 1
    %s176 = scalar_lea.vmem %s1, 8
    %177 = vst [vmem:[%s176] sm:%s175] %v173
    %s178 = scalar_lea.vmem [#allocation0], 24
    %v179 = vld [vmem:[%s178] sm:%s161]
    %s181 = ssub.s32 16, 1
    %s182 = scalar_lea.vmem %s1, 12
    %183 = vst [vmem:[%s182] sm:%s181] %v179

// kernel: fourier_layer_forward.1
$region0: #{fourier_layer_forward.1}
  #allocation0 [shape = 'u32[]', space=smem, size = 0x4, offset = 0x4, fixed_abs, tag = 'smem constant byte address 0x4 - core index']
  #allocation1 [shape = 'u32[72,128]{1,0:T(1,128)}', space=vmem, size = 0x9000, scoped, tag = 'internal scratch']
  %s0 = inlined_call_operand.vmem [shape: f32[2,2,4,16], index: 0, kind: input, shape index: {}]
  %s1 = inlined_call_operand.vmem [shape: f32[2,2,4,16], index: 1, kind: input, shape index: {}]
  %s2 = inlined_call_operand.vmem [shape: f32[2,4,4,16], index: 2, kind: input, shape index: {}]
  %s3 = inlined_call_operand.vmem [shape: f32[2,4,4,16], index: 3, kind: input, shape index: {}]
  %s4 = inlined_call_operand.vmem [shape: f32[2,2,4,16], index: 4, kind: output, shape index: {0}]
  %s5 = inlined_call_operand.vmem [shape: f32[2,2,4,16], index: 5, kind: output, shape index: {1}]
  %6 = xla_tuple %s4, %s5
  %s7 = sld [smem:[#allocation0]]
  $region57: #{fourier_layer_forward.1} parent=0
    _
  %s9 = ssub.s32 1, %s7
  %s10 = scalar_select 0, %s9, %s7
  loop: start=0, step=1, limit=4
  $region2: #{fourier_layer_forward.1} parent=0 // loop_pre_header
    _
  $region3: #{fourier_layer_forward.1} parent=0 // loop_header
    %s12 = sphi 0, %s16
    %p13 = scmp.ge.s32.totalorder %s12, 4
    %s19 = sphi 0, %s31
    %s20 = sphi 0, %s27
    %s21 = sphi 0, %s19
    %s22 = sphi 0, %s20
    %s23 = sphi 0, %s21
    %s24 = sphi 0, %s22
    %s36 = sphi 0, %s38
    %s39 = sphi 0, %s36
    %s40 = sphi 0, %s39
    %s56 = sphi 0, %s40
    %s64 = sphi 0, %s66
    %s67 = sphi 0, %s64
    %s68 = sphi 0, %s67
    %s84 = sphi 0, %s68
    %s90 = sphi 0, %s92
    %s93 = sphi 0, %s90
    %s94 = sphi 0, %s93
    %s110 = sphi 0, %s94
    %s116 = sphi 0, %s118
    %s119 = sphi 0, %s116
    %s120 = sphi 0, %s119
    %s136 = sphi 0, %s120
    %s144 = sphi 0, %s146
    %s147 = sphi 0, %s144
    %s148 = sphi 0, %s147
    %s164 = sphi 0, %s148
    %s172 = sphi 0, %s174
    %s175 = sphi 0, %s172
    %s176 = sphi 0, %s175
    %s192 = sphi 0, %s176
  $region4: #{fourier_layer_forward.1} parent=0 // loop_header_branch
    %15 = sbr.rel (%p13) target = $region8
  $region5: #{fourier_layer_forward.1} parent=0 // loop_body
    %s17 = ssub.s32 %s12, 1
    %s18 = ssub.s32 %s12, 2
    %s25 = sadd.s32 1, %s20
    %p26 = scmp.ge.s32.totalorder %s25, 1
    %s27 = scalar_select %p26, 0, %s25
    %s28 = sadd.s32 1, %s19
    %s29 = scalar_select %p26, %s28, %s19
    %p30 = scmp.ge.s32.totalorder %s29, 2
    %s31 = scalar_select %p30, 0, %s29
    %s32 = ssub.s32 %s19, %s31
    %s33 = ssub.s32 %s20, %s27
    %s34 = sor.u32 %s32, %s33
    %p35 = scmp.eq.s32.totalorder %s34, 0
    %s37 = sadd.s32 %s36, 1
    %s38 = scalar_select %p35, %s36, %s37
    %p41 = pneg %p35
    %p42 = scmp.eq.s32.totalorder %s12, 1
    %p43 = por %p41, %p42
    %p44 = scmp.ne.s32.totalorder %s36, %s39
    %p45 = scmp.eq.s32.totalorder %s12, 0
    %p46 = por %p44, %p45
    %p47 = scmp.ne.s32.totalorder %s36, %s39
    %p48 = scmp.eq.s32.totalorder %s17, 1
    %p49 = por %p47, %p48
    %p50 = scmp.ne.s32.totalorder %s39, %s40
    %p51 = scmp.eq.s32.totalorder %s17, 0
    %p52 = por %p50, %p51
    %p53 = scmp.ne.s32.totalorder %s39, %s40
    %p54 = scmp.eq.s32.totalorder %s18, 1
    %p55 = por %p53, %p54
    %p57 = scmp.ne.s32.totalorder %s40, %s56
    %p58 = scmp.eq.s32.totalorder %s18, 0
    %p59 = por %p57, %p58
    %s60 = ssub.s32 %s19, %s31
    %s61 = ssub.s32 %s20, %s27
    %s62 = sor.u32 %s60, %s61
    %p63 = scmp.eq.s32.totalorder %s62, 0
    %s65 = sadd.s32 %s64, 1
    %s66 = scalar_select %p63, %s64, %s65
    %p69 = pneg %p63
    %p70 = scmp.eq.s32.totalorder %s12, 1
    %p71 = por %p69, %p70
    %p72 = scmp.ne.s32.totalorder %s64, %s67
    %p73 = scmp.eq.s32.totalorder %s12, 0
    %p74 = por %p72, %p73
    %p75 = scmp.ne.s32.totalorder %s64, %s67
    %p76 = scmp.eq.s32.totalorder %s17, 1
    %p77 = por %p75, %p76
    %p78 = scmp.ne.s32.totalorder %s67, %s68
    %p79 = scmp.eq.s32.totalorder %s17, 0
    %p80 = por %p78, %p79
    %p81 = scmp.ne.s32.totalorder %s67, %s68
    %p82 = scmp.eq.s32.totalorder %s18, 1
    %p83 = por %p81, %p82
    %p85 = scmp.ne.s32.totalorder %s68, %s84
    %p86 = scmp.eq.s32.totalorder %s18, 0
    %p87 = por %p85, %p86
    %s88 = ssub.s32 %s19, %s31
    %p89 = scmp.eq.s32.totalorder %s88, 0
    %s91 = sadd.s32 %s90, 1
    %s92 = scalar_select %p89, %s90, %s91
    %p95 = pneg %p89
    %p96 = scmp.eq.s32.totalorder %s12, 1
    %p97 = por %p95, %p96
    %p98 = scmp.ne.s32.totalorder %s90, %s93
    %p99 = scmp.eq.s32.totalorder %s12, 0
    %p100 = por %p98, %p99
    %p101 = scmp.ne.s32.totalorder %s90, %s93
    %p102 = scmp.eq.s32.totalorder %s17, 1
    %p103 = por %p101, %p102
    %p104 = scmp.ne.s32.totalorder %s93, %s94
    %p105 = scmp.eq.s32.totalorder %s17, 0
    %p106 = por %p104, %p105
    %p107 = scmp.ne.s32.totalorder %s93, %s94
    %p108 = scmp.eq.s32.totalorder %s18, 1
    %p109 = por %p107, %p108
    %p111 = scmp.ne.s32.totalorder %s94, %s110
    %p112 = scmp.eq.s32.totalorder %s18, 0
    %p113 = por %p111, %p112
    %s114 = ssub.s32 %s19, %s31
    %p115 = scmp.eq.s32.totalorder %s114, 0
    %s117 = sadd.s32 %s116, 1
    %s118 = scalar_select %p115, %s116, %s117
    %p121 = pneg %p115
    %p122 = scmp.eq.s32.totalorder %s12, 1
    %p123 = por %p121, %p122
    %p124 = scmp.ne.s32.totalorder %s116, %s119
    %p125 = scmp.eq.s32.totalorder %s12, 0
    %p126 = por %p124, %p125
    %p127 = scmp.ne.s32.totalorder %s116, %s119
    %p128 = scmp.eq.s32.totalorder %s17, 1
    %p129 = por %p127, %p128
    %p130 = scmp.ne.s32.totalorder %s119, %s120
    %p131 = scmp.eq.s32.totalorder %s17, 0
    %p132 = por %p130, %p131
    %p133 = scmp.ne.s32.totalorder %s119, %s120
    %p134 = scmp.eq.s32.totalorder %s18, 1
    %p135 = por %p133, %p134
    %p137 = scmp.ne.s32.totalorder %s120, %s136
    %p138 = scmp.eq.s32.totalorder %s18, 0
    %p139 = por %p137, %p138
    %s140 = ssub.s32 %s19, %s31
    %s141 = ssub.s32 %s20, %s27
    %s142 = sor.u32 %s140, %s141
    %p143 = scmp.eq.s32.totalorder %s142, 0
    %s145 = sadd.s32 %s144, 1
    %s146 = scalar_select %p143, %s144, %s145
    %p149 = pneg %p143
    %p150 = scmp.eq.s32.totalorder %s12, 1
    %p151 = por %p149, %p150
    %p152 = scmp.ne.s32.totalorder %s144, %s147
    %p153 = scmp.eq.s32.totalorder %s12, 0
    %p154 = por %p152, %p153
    %p155 = scmp.ne.s32.totalorder %s144, %s147
    %p156 = scmp.eq.s32.totalorder %s17, 1
    %p157 = por %p155, %p156
    %p158 = scmp.ne.s32.totalorder %s147, %s148
    %p159 = scmp.eq.s32.totalorder %s17, 0
    %p160 = por %p158, %p159
    %p161 = scmp.ne.s32.totalorder %s147, %s148
    %p162 = scmp.eq.s32.totalorder %s18, 1
    %p163 = por %p161, %p162
    %p165 = scmp.ne.s32.totalorder %s148, %s164
    %p166 = scmp.eq.s32.totalorder %s18, 0
    %p167 = por %p165, %p166
    %s168 = ssub.s32 %s19, %s31
    %s169 = ssub.s32 %s20, %s27
    %s170 = sor.u32 %s168, %s169
    %p171 = scmp.eq.s32.totalorder %s170, 0
    %s173 = sadd.s32 %s172, 1
    %s174 = scalar_select %p171, %s172, %s173
    %p177 = pneg %p171
    %p178 = scmp.eq.s32.totalorder %s12, 1
    %p179 = por %p177, %p178
    %p180 = scmp.ne.s32.totalorder %s172, %s175
    %p181 = scmp.eq.s32.totalorder %s12, 0
    %p182 = por %p180, %p181
    %p183 = scmp.ne.s32.totalorder %s172, %s175
    %p184 = scmp.eq.s32.totalorder %s17, 1
    %p185 = por %p183, %p184
    %p186 = scmp.ne.s32.totalorder %s175, %s176
    %p187 = scmp.eq.s32.totalorder %s17, 0
    %p188 = por %p186, %p187
    %p189 = scmp.ne.s32.totalorder %s175, %s176
    %p190 = scmp.eq.s32.totalorder %s18, 1
    %p191 = por %p189, %p190
    %p193 = scmp.ne.s32.totalorder %s176, %s192
    %p194 = scmp.eq.s32.totalorder %s18, 0
    %p195 = por %p193, %p194
    %p196 = scmp.le.s32.totalorder 1, %s12
    %p197 = scmp.lt.s32.totalorder %s12, 3
    %p198 = pnand %p196, %p197
    %p199 = pneg %p198
    // Predicated region
    $region9: #{fourier_layer_forward.1} parent=5 // pred_check
      _
    $region10: #{fourier_layer_forward.1} parent=5 // pred_check_branch
      %201 = sbr.rel (%p198) target = $region12
    $region11: #{fourier_layer_forward.1} parent=5 // pred_region
      %s202 = ssub.s32 %s12, 1
    $region12: #{fourier_layer_forward.1} parent=5 // pred_fallthru
      _
    %p203 = scmp.lt.s32.totalorder %s12, 2
    // Predicated region
    $region13: #{fourier_layer_forward.1} parent=5 // pred_check
      %p204 = pneg %p203
    $region14: #{fourier_layer_forward.1} parent=5 // pred_check_branch
      %206 = sbr.rel (%p204) target = $region16
    $region15: #{fourier_layer_forward.1} parent=5 // pred_region
      // Predicated region
      $region17: #{fourier_layer_forward.1} parent=15 // pred_check
        %p207 = pneg %p46
      $region18: #{fourier_layer_forward.1} parent=15 // pred_check_branch
        %209 = sbr.rel (%p207) target = $region20
      $region19: #{fourier_layer_forward.1} parent=15 // pred_region
        %s210 = smul.u32 2, %s20
        %p211 = scmp.lt.s32.totalorder %s19, 1
        %s212 = scalar_select %p211, %s19, 1
        %p213 = scmp.lt.s32.totalorder %s210, 1
        %s214 = scalar_select %p213, %s210, 1
        %s215 = smul.addr %s212, 2
        %s216 = sadd.s32 %s214, %s215
        %s217 = smul.addr %s216, 4
        %s218 = scalar_lea.vmem %s0, %s217
        %s219 = smul.u32 2, %s20
      $region20: #{fourier_layer_forward.1} parent=15 // pred_fallthru
        _
      // Predicated region
      $region21: #{fourier_layer_forward.1} parent=15 // pred_check
        %p220 = pneg %p74
      $region22: #{fourier_layer_forward.1} parent=15 // pred_check_branch
        %222 = sbr.rel (%p220) target = $region24
      $region23: #{fourier_layer_forward.1} parent=15 // pred_region
        %s223 = smul.u32 2, %s20
        %p224 = scmp.lt.s32.totalorder %s19, 1
        %s225 = scalar_select %p224, %s19, 1
        %p226 = scmp.lt.s32.totalorder %s223, 1
        %s227 = scalar_select %p226, %s223, 1
        %s228 = smul.addr %s225, 2
        %s229 = sadd.s32 %s227, %s228
        %s230 = smul.addr %s229, 4
        %s231 = scalar_lea.vmem %s1, %s230
        %s232 = smul.u32 2, %s20
      $region24: #{fourier_layer_forward.1} parent=15 // pred_fallthru
        _
      // Predicated region
      $region25: #{fourier_layer_forward.1} parent=15 // pred_check
        %p233 = pneg %p100
      $region26: #{fourier_layer_forward.1} parent=15 // pred_check_branch
        %235 = sbr.rel (%p233) target = $region28
      $region27: #{fourier_layer_forward.1} parent=15 // pred_region
        %p236 = scmp.lt.s32.totalorder %s19, 1
        %s237 = scalar_select %p236, %s19, 1
        %s238 = smul.addr %s237, 4
        %s239 = smul.addr %s238, 4
        %s240 = scalar_lea.vmem %s2, %s239
      $region28: #{fourier_layer_forward.1} parent=15 // pred_fallthru
        _
      // Predicated region
      $region29: #{fourier_layer_forward.1} parent=15 // pred_check
        %p241 = pneg %p126
      $region30: #{fourier_layer_forward.1} parent=15 // pred_check_branch
        %243 = sbr.rel (%p241) target = $region32
      $region31: #{fourier_layer_forward.1} parent=15 // pred_region
        %p244 = scmp.lt.s32.totalorder %s19, 1
        %s245 = scalar_select %p244, %s19, 1
        %s246 = smul.addr %s245, 4
        %s247 = smul.addr %s246, 4
        %s248 = scalar_lea.vmem %s3, %s247
      $region32: #{fourier_layer_forward.1} parent=15 // pred_fallthru
        _
    $region16: #{fourier_layer_forward.1} parent=5 // pred_fallthru
      _
    %p249 = scmp.le.s32.totalorder 1, %s12
    %p250 = scmp.lt.s32.totalorder %s12, 3
    %p251 = pnand %p249, %p250
    %p252 = pneg %p251
    // Predicated region
    $region33: #{fourier_layer_forward.1} parent=5 // pred_check
      _
    $region34: #{fourier_layer_forward.1} parent=5 // pred_check_branch
      %254 = sbr.rel (%p251) target = $region36
    $region35: #{fourier_layer_forward.1} parent=5 // pred_region
      %s255 = ssub.s32 %s12, 1
      %s256 = smul.u32 2, %s22
      %p257 = scmp.lt.s32.totalorder %s21, 1
      %s258 = scalar_select %p257, %s21, 1
      %p259 = scmp.lt.s32.totalorder %s256, 1
      %s260 = scalar_select %p259, %s256, 1
      %s261 = smul.addr %s258, 2
      %s262 = sadd.s32 %s260, %s261
      %s263 = smul.addr %s262, 4
      %s264 = scalar_lea.vmem %s0, %s263
      %p265 = pneg %p52
      %p266 = pneg %p49
      %s267 = smul.u32 2, %s22
      %p268 = scmp.lt.s32.totalorder %s21, 1
      %s269 = scalar_select %p268, %s21, 1
      %p270 = scmp.lt.s32.totalorder %s267, 1
      %s271 = scalar_select %p270, %s267, 1
      %s272 = smul.addr %s269, 2
      %s273 = sadd.s32 %s271, %s272
      %s274 = smul.addr %s273, 4
      %s275 = scalar_lea.vmem %s1, %s274
      %p276 = pneg %p80
      %p277 = pneg %p77
      %p278 = scmp.lt.s32.totalorder %s21, 1
      %s279 = scalar_select %p278, %s21, 1
      %s280 = smul.addr %s279, 4
      %s281 = smul.addr %s280, 4
      %s282 = scalar_lea.vmem %s2, %s281
      %p283 = pneg %p106
      %p284 = pneg %p103
      %p285 = scmp.lt.s32.totalorder %s21, 1
      %s286 = scalar_select %p285, %s21, 1
      %s287 = smul.addr %s286, 4
      %s288 = smul.addr %s287, 4
      %s289 = scalar_lea.vmem %s3, %s288
      %p290 = pneg %p132
      %p291 = pneg %p129
      %p292 = pneg %p160
      %p293 = pneg %p157
      %s294 = smul.u32 2, %s22
      %p295 = scmp.lt.s32.totalorder %s21, 1
      %s296 = scalar_select %p295, %s21, 1
      %p297 = scmp.lt.s32.totalorder %s294, 1
      %s298 = scalar_select %p297, %s294, 1
      %s299 = smul.addr %s296, 2
      %s300 = sadd.s32 %s298, %s299
      %s301 = smul.addr %s300, 4
      %s302 = scalar_lea.vmem %s4, %s301
      %p303 = pneg %p188
      %p304 = pneg %p185
      %s305 = smul.u32 2, %s22
      %p306 = scmp.lt.s32.totalorder %s21, 1
      %s307 = scalar_select %p306, %s21, 1
      %p308 = scmp.lt.s32.totalorder %s305, 1
      %s309 = scalar_select %p308, %s305, 1
      %s310 = smul.addr %s307, 2
      %s311 = sadd.s32 %s309, %s310
      %s312 = smul.addr %s311, 4
      %s313 = scalar_lea.vmem %s5, %s312
      %s314 = smul.u32 2, %s22
      %p315 = scmp.lt.s32.totalorder %s21, 1
      %s316 = scalar_select %p315, %s21, 1
      %p317 = scmp.lt.s32.totalorder %s314, 1
      %s318 = scalar_select %p317, %s314, 1
      %s319 = smul.addr %s316, 2
      %s320 = sadd.s32 %s318, %s319
      %s321 = smul.addr %s320, 4
      %s322 = scalar_lea.vmem %s0, %s321
      %s323 = smul.u32 2, %s22
      %s324 = smul.u32 2, %s22
      %p325 = scmp.lt.s32.totalorder %s21, 1
      %s326 = scalar_select %p325, %s21, 1
      %p327 = scmp.lt.s32.totalorder %s324, 1
      %s328 = scalar_select %p327, %s324, 1
      %s329 = smul.addr %s326, 2
      %s330 = sadd.s32 %s328, %s329
      %s331 = smul.addr %s330, 4
      %s332 = scalar_lea.vmem %s1, %s331
      %s333 = smul.u32 2, %s22
      %p334 = scmp.lt.s32.totalorder %s21, 1
      %s335 = scalar_select %p334, %s21, 1
      %s336 = smul.addr %s335, 4
      %s337 = smul.addr %s336, 4
      %s338 = scalar_lea.vmem %s2, %s337
      %p339 = scmp.lt.s32.totalorder %s21, 1
      %s340 = scalar_select %p339, %s21, 1
      %s341 = smul.addr %s340, 4
      %s342 = smul.addr %s341, 4
      %s343 = scalar_lea.vmem %s3, %s342
      %s344 = smul.u32 2, %s22
      %p345 = scmp.lt.s32.totalorder %s21, 1
      %s346 = scalar_select %p345, %s21, 1
      %p347 = scmp.lt.s32.totalorder %s344, 1
      %s348 = scalar_select %p347, %s344, 1
      %s349 = smul.addr %s346, 2
      %s350 = sadd.s32 %s348, %s349
      %s351 = smul.addr %s350, 4
      %s352 = scalar_lea.vmem %s4, %s351
      %s353 = smul.u32 2, %s22
      %s354 = smul.u32 2, %s22
      %p355 = scmp.lt.s32.totalorder %s21, 1
      %s356 = scalar_select %p355, %s21, 1
      %p357 = scmp.lt.s32.totalorder %s354, 1
      %s358 = scalar_select %p357, %s354, 1
      %s359 = smul.addr %s356, 2
      %s360 = sadd.s32 %s358, %s359
      %s361 = smul.addr %s360, 4
      %s362 = scalar_lea.vmem %s5, %s361
      %s363 = smul.u32 2, %s22
      %vm364 = vcmask 125952
      %365 = vst.msk [vmem:[%s352] sm:$0xf] %vm364, 0.0
      %366 = vst.msk [vmem:[%s352 + $0x4] sm:$0xf] %vm364, 0.0
      %367 = vst.msk [vmem:[%s362] sm:$0xf] %vm364, 0.0
      %368 = vst.msk [vmem:[%s362 + $0x4] sm:$0xf] %vm364, 0.0
      %v369 = vld [vmem:[%s322] sm:$0x1]
      %v370 = vld [vmem:[%s322 + $0x4] sm:$0x1]
      %v371 = vld [vmem:[%s332] sm:$0x1]
      %v372 = vld [vmem:[%s332 + $0x4] sm:$0x1]
      %v373 = vld [vmem:[%s338] sm:$0xf]
      %v374 = vld [vmem:[%s343] sm:$0xf]
      %v375 = vld [vmem:[%s352] sm:$0xf]
      %v376 = vld [vmem:[%s352 + $0x4] sm:$0xf]
      %v377 = vperm.slane %v369, 0
      %v378 = vperm.slane %v370, 0
      %v379 = vmul.f32 %v377, %v373
      %v380 = vmul.f32 %v378, %v373
      %v381 = vperm.slane %v371, 0
      %v382 = vperm.slane %v372, 0
      %v383 = vmul.f32 %v381, %v374
      %v384 = vmul.f32 %v382, %v374
      %v385 = vsub.f32 %v379, %v383
      %v386 = vsub.f32 %v380, %v384
      %v387 = vadd.f32 %v375, %v385
      %v388 = vadd.f32 %v376, %v386
      %389 = vst.msk [vmem:[%s352] sm:$0xf] %vm364, %v387
      %390 = vst.msk [vmem:[%s352 + $0x4] sm:$0xf] %vm364, %v388
      %v391 = vld [vmem:[%s362] sm:$0xf]
      %v392 = vld [vmem:[%s362 + $0x4] sm:$0xf]
      %v393 = vmul.f32 %v381, %v373
      %v394 = vmul.f32 %v382, %v373
      %v395 = vmul.f32 %v377, %v374
      %v396 = vmul.f32 %v378, %v374
      %v397 = vadd.f32 %v393, %v395
      %v398 = vadd.f32 %v394, %v396
      %v399 = vadd.f32 %v391, %v397
      %v400 = vadd.f32 %v392, %v398
      %401 = vst.msk [vmem:[%s362] sm:$0xf] %vm364, %v399
      %402 = vst.msk [vmem:[%s362 + $0x4] sm:$0xf] %vm364, %v400
      %v403 = vld [vmem:[%s322 + $0x1] sm:$0x1]
      %v404 = vld [vmem:[%s322 + $0x5] sm:$0x1]
      %v405 = vld [vmem:[%s332 + $0x1] sm:$0x1]
      %v406 = vld [vmem:[%s332 + $0x5] sm:$0x1]
      %s407 = scalar_lea.vmem %s338, 4
      %v408 = vld [vmem:[%s407] sm:$0xf]
      %s409 = scalar_lea.vmem %s343, 4
      %v410 = vld [vmem:[%s409] sm:$0xf]
      %v411 = vld [vmem:[%s352] sm:$0xf]
      %v412 = vld [vmem:[%s352 + $0x4] sm:$0xf]
      %v413 = vperm.slane %v403, 0
      %v414 = vperm.slane %v404, 0
      %v415 = vmul.f32 %v413, %v408
      %v416 = vmul.f32 %v414, %v408
      %v417 = vperm.slane %v405, 0
      %v418 = vperm.slane %v406, 0
      %v419 = vmul.f32 %v417, %v410
      %v420 = vmul.f32 %v418, %v410
      %v421 = vsub.f32 %v415, %v419
      %v422 = vsub.f32 %v416, %v420
      %v423 = vadd.f32 %v411, %v421
      %v424 = vadd.f32 %v412, %v422
      %425 = vst.msk [vmem:[%s352] sm:$0xf] %vm364, %v423
      %426 = vst.msk [vmem:[%s352 + $0x4] sm:$0xf] %vm364, %v424
      %v427 = vld [vmem:[%s362] sm:$0xf]
      %v428 = vld [vmem:[%s362 + $0x4] sm:$0xf]
      %v429 = vmul.f32 %v417, %v408
      %v430 = vmul.f32 %v418, %v408
      %v431 = vmul.f32 %v413, %v410
      %v432 = vmul.f32 %v414, %v410
      %v433 = vadd.f32 %v429, %v431
      %v434 = vadd.f32 %v430, %v432
      %v435 = vadd.f32 %v427, %v433
      %v436 = vadd.f32 %v428, %v434
      %437 = vst.msk [vmem:[%s362] sm:$0xf] %vm364, %v435
      %438 = vst.msk [vmem:[%s362 + $0x4] sm:$0xf] %vm364, %v436
      %v439 = vld [vmem:[%s322 + $0x2] sm:$0x1]
      %v440 = vld [vmem:[%s322 + $0x6] sm:$0x1]
      %v441 = vld [vmem:[%s332 + $0x2] sm:$0x1]
      %v442 = vld [vmem:[%s332 + $0x6] sm:$0x1]
      %s443 = scalar_lea.vmem %s338, 8
      %v444 = vld [vmem:[%s443] sm:$0xf]
      %s445 = scalar_lea.vmem %s343, 8
      %v446 = vld [vmem:[%s445] sm:$0xf]
      %v447 = vld [vmem:[%s352] sm:$0xf]
      %v448 = vld [vmem:[%s352 + $0x4] sm:$0xf]
      %v449 = vperm.slane %v439, 0
      %v450 = vperm.slane %v440, 0
      %v451 = vmul.f32 %v449, %v444
      %v452 = vmul.f32 %v450, %v444
      %v453 = vperm.slane %v441, 0
      %v454 = vperm.slane %v442, 0
      %v455 = vmul.f32 %v453, %v446
      %v456 = vmul.f32 %v454, %v446
      %v457 = vsub.f32 %v451, %v455
      %v458 = vsub.f32 %v452, %v456
      %v459 = vadd.f32 %v447, %v457
      %v460 = vadd.f32 %v448, %v458
      %461 = vst.msk [vmem:[%s352] sm:$0xf] %vm364, %v459
      %462 = vst.msk [vmem:[%s352 + $0x4] sm:$0xf] %vm364, %v460
      %v463 = vld [vmem:[%s362] sm:$0xf]
      %v464 = vld [vmem:[%s362 + $0x4] sm:$0xf]
      %v465 = vmul.f32 %v453, %v444
      %v466 = vmul.f32 %v454, %v444
      %v467 = vmul.f32 %v449, %v446
      %v468 = vmul.f32 %v450, %v446
      %v469 = vadd.f32 %v465, %v467
      %v470 = vadd.f32 %v466, %v468
      %v471 = vadd.f32 %v463, %v469
      %v472 = vadd.f32 %v464, %v470
      %473 = vst.msk [vmem:[%s362] sm:$0xf] %vm364, %v471
      %474 = vst.msk [vmem:[%s362 + $0x4] sm:$0xf] %vm364, %v472
      %v475 = vld [vmem:[%s322 + $0x3] sm:$0x1]
      %v476 = vld [vmem:[%s322 + $0x7] sm:$0x1]
      %v477 = vld [vmem:[%s332 + $0x3] sm:$0x1]
      %v478 = vld [vmem:[%s332 + $0x7] sm:$0x1]
      %s479 = scalar_lea.vmem %s338, 12
      %v480 = vld [vmem:[%s479] sm:$0xf]
      %s481 = scalar_lea.vmem %s343, 12
      %v482 = vld [vmem:[%s481] sm:$0xf]
      %v483 = vld [vmem:[%s352] sm:$0xf]
      %v484 = vld [vmem:[%s352 + $0x4] sm:$0xf]
      %v485 = vperm.slane %v475, 0
      %v486 = vperm.slane %v476, 0
      %v487 = vmul.f32 %v485, %v480
      %v488 = vmul.f32 %v486, %v480
      %v489 = vperm.slane %v477, 0
      %v490 = vperm.slane %v478, 0
      %v491 = vmul.f32 %v489, %v482
      %v492 = vmul.f32 %v490, %v482
      %v493 = vsub.f32 %v487, %v491
      %v494 = vsub.f32 %v488, %v492
      %v495 = vadd.f32 %v483, %v493
      %v496 = vadd.f32 %v484, %v494
      %497 = vst.msk [vmem:[%s352] sm:$0xf] %vm364, %v495
      %498 = vst.msk [vmem:[%s352 + $0x4] sm:$0xf] %vm364, %v496
      %v499 = vld [vmem:[%s362] sm:$0xf]
      %v500 = vld [vmem:[%s362 + $0x4] sm:$0xf]
      %v501 = vmul.f32 %v489, %v480
      %v502 = vmul.f32 %v490, %v480
      %v503 = vmul.f32 %v485, %v482
      %v504 = vmul.f32 %v486, %v482
      %v505 = vadd.f32 %v501, %v503
      %v506 = vadd.f32 %v502, %v504
      %v507 = vadd.f32 %v499, %v505
      %v508 = vadd.f32 %v500, %v506
      %509 = vst.msk [vmem:[%s362] sm:$0xf] %vm364, %v507
      %510 = vst.msk [vmem:[%s362 + $0x4] sm:$0xf] %vm364, %v508
      %s511 = smul.u32 2, %s22
      %p512 = scmp.lt.s32.totalorder %s21, 1
      %s513 = scalar_select %p512, %s21, 1
      %p514 = scmp.lt.s32.totalorder %s511, 1
      %s515 = scalar_select %p514, %s511, 1
      %s516 = smul.addr %s513, 2
      %s517 = sadd.s32 %s515, %s516
      %s518 = smul.addr %s517, 4
      %s519 = scalar_lea.vmem %s4, %s518
      %s520 = smul.u32 2, %s22
      %p521 = scmp.lt.s32.totalorder %s21, 1
      %s522 = scalar_select %p521, %s21, 1
      %p523 = scmp.lt.s32.totalorder %s520, 1
      %s524 = scalar_select %p523, %s520, 1
      %s525 = smul.addr %s522, 2
      %s526 = sadd.s32 %s524, %s525
      %s527 = smul.addr %s526, 4
      %s528 = scalar_lea.vmem %s5, %s527
      // Predicated region
      $region37: #{fourier_layer_forward.1} parent=35 // pred_check
        %p529 = pneg %p157
      $region38: #{fourier_layer_forward.1} parent=35 // pred_check_branch
        %531 = sbr.rel (%p529) target = $region40
      $region39: #{fourier_layer_forward.1} parent=35 // pred_region
        %s532 = smul.u32 2, %s22
      $region40: #{fourier_layer_forward.1} parent=35 // pred_fallthru
        _
      // Predicated region
      $region41: #{fourier_layer_forward.1} parent=35 // pred_check
        %p533 = pneg %p185
      $region42: #{fourier_layer_forward.1} parent=35 // pred_check_branch
        %535 = sbr.rel (%p533) target = $region44
      $region43: #{fourier_layer_forward.1} parent=35 // pred_region
        %s536 = smul.u32 2, %s22
      $region44: #{fourier_layer_forward.1} parent=35 // pred_fallthru
        _
    $region36: #{fourier_layer_forward.1} parent=5 // pred_fallthru
      _
    %p537 = scmp.le.s32.totalorder 2, %s12
    // Predicated region
    $region45: #{fourier_layer_forward.1} parent=5 // pred_check
      %p538 = pneg %p537
    $region46: #{fourier_layer_forward.1} parent=5 // pred_check_branch
      %540 = sbr.rel (%p538) target = $region48
    $region47: #{fourier_layer_forward.1} parent=5 // pred_region
      %s541 = ssub.s32 %s12, 2
      // Predicated region
      $region49: #{fourier_layer_forward.1} parent=47 // pred_check
        %p542 = pneg %p163
      $region50: #{fourier_layer_forward.1} parent=47 // pred_check_branch
        %544 = sbr.rel (%p542) target = $region52
      $region51: #{fourier_layer_forward.1} parent=47 // pred_region
        %s545 = smul.u32 2, %s24
        %p546 = scmp.lt.s32.totalorder %s23, 1
        %s547 = scalar_select %p546, %s23, 1
        %p548 = scmp.lt.s32.totalorder %s545, 1
        %s549 = scalar_select %p548, %s545, 1
        %s550 = smul.addr %s547, 2
        %s551 = sadd.s32 %s549, %s550
        %s552 = smul.addr %s551, 4
        %s553 = scalar_lea.vmem %s4, %s552
      $region52: #{fourier_layer_forward.1} parent=47 // pred_fallthru
        _
      // Predicated region
      $region53: #{fourier_layer_forward.1} parent=47 // pred_check
        %p554 = pneg %p191
      $region54: #{fourier_layer_forward.1} parent=47 // pred_check_branch
        %556 = sbr.rel (%p554) target = $region56
      $region55: #{fourier_layer_forward.1} parent=47 // pred_region
        %s557 = smul.u32 2, %s24
        %p558 = scmp.lt.s32.totalorder %s23, 1
        %s559 = scalar_select %p558, %s23, 1
        %p560 = scmp.lt.s32.totalorder %s557, 1
        %s561 = scalar_select %p560, %s557, 1
        %s562 = smul.addr %s559, 2
        %s563 = sadd.s32 %s561, %s562
        %s564 = smul.addr %s563, 4
        %s565 = scalar_lea.vmem %s5, %s564
      $region56: #{fourier_layer_forward.1} parent=47 // pred_fallthru
        _
    $region48: #{fourier_layer_forward.1} parent=5 // pred_fallthru
      _
  $region6: #{fourier_layer_forward.1} parent=0 // loop_footer
    %s16 = sadd.s32 1, %s12
  $region7: #{fourier_layer_forward.1} parent=0 // loop_footer_branch
    %11 = sbr.rel target = $region3
  $region8: #{fourier_layer_forward.1} parent=0 // loop_exit
    _

// kernel: reverse.1
$region0: #{reverse.1}
  %s0 = inlined_call_operand.vmem [shape: f32[2,4,16,7], index: 0, kind: input, shape index: {}]
  %s1 = inlined_call_operand.vmem [shape: f32[2,4,16,7], index: 1, kind: output, shape index: {}]
  $region1: #{reverse.1} parent=0
    #allocation0 [shape = 'u8[65536]{0}', space=vmem, size = 0x10000, scoped, tag = 'operand span for operand 0']
    #allocation1 [shape = 'u8[32768]{0}', space=vmem, size = 0x8000, scoped, tag = 'operand span for operand 1']
    %s2 = scalar_lea.vmem [#allocation0], 8
    // Predicated region
    $region2: #{reverse.1} parent=1 // pred_check
      _
    $region3: #{reverse.1} parent=1 // pred_check_branch
      %4 = sbr.rel (0) target = $region5
    $region4: #{reverse.1} parent=1 // pred_region
      // Predicated region
      $region6: #{reverse.1} parent=4 // pred_check
        _
      $region7: #{reverse.1} parent=4 // pred_check_branch
        %6 = sbr.rel (0) target = $region9
      $region8: #{reverse.1} parent=4 // pred_region
        // Predicated region
        $region21: #{reverse.1} parent=8 // pred_check
          _
        $region22: #{reverse.1} parent=8 // pred_check_branch
          %36 = sbr.rel (0) target = $region24
        $region23: #{reverse.1} parent=8 // pred_region
          loop: start=0, step=1, limit=1
          $region25: #{reverse.1} parent=23 // loop_pre_header
            _
          $region26: #{reverse.1} parent=23 // loop_header
            %s38 = sphi 0, %s42
            %p39 = scmp.ge.s32.totalorder %s38, 1
            %s43 = sphi %s0, %s0
            %s44 = sphi %s2, %s2
          $region27: #{reverse.1} parent=23 // loop_header_branch
            %41 = sbr.rel (%p39) target = $region31
          $region28: #{reverse.1} parent=23 // loop_body
            %v45 = vld [vmem:[%s43] sm:$0xff]
            %46 = vst [vmem:[%s44] sm:$0xff] %v45
            %v47 = vld [vmem:[%s43 + $0x8] sm:$0xff]
            %48 = vst [vmem:[%s44 + $0x10] sm:$0xff] %v47
            %v49 = vld [vmem:[%s43 + $0x10] sm:$0xff]
            %50 = vst [vmem:[%s44 + $0x20] sm:$0xff] %v49
            %v51 = vld [vmem:[%s43 + $0x18] sm:$0xff]
            %52 = vst [vmem:[%s44 + $0x30] sm:$0xff] %v51
            %v53 = vld [vmem:[%s43 + $0x20] sm:$0xff]
            %54 = vst [vmem:[%s44 + $0x40] sm:$0xff] %v53
            %v55 = vld [vmem:[%s43 + $0x28] sm:$0xff]
            %56 = vst [vmem:[%s44 + $0x50] sm:$0xff] %v55
            %v57 = vld [vmem:[%s43 + $0x30] sm:$0xff]
            %58 = vst [vmem:[%s44 + $0x60] sm:$0xff] %v57
            %v59 = vld [vmem:[%s43 + $0x38] sm:$0xff]
            %60 = vst [vmem:[%s44 + $0x70] sm:$0xff] %v59
          $region29: #{reverse.1} parent=23 // loop_footer
            %s42 = sadd.s32 1, %s38
          $region30: #{reverse.1} parent=23 // loop_footer_branch
            %37 = sbr.rel target = $region26
          $region31: #{reverse.1} parent=23 // loop_exit
            _
        $region24: #{reverse.1} parent=8 // pred_fallthru
          _
        // Predicated region
        $region32: #{reverse.1} parent=8 // pred_check
          _
        $region33: #{reverse.1} parent=8 // pred_check_branch
          %62 = sbr.rel target = $region35
        $region34: #{reverse.1} parent=8 // pred_region
          _
        $region35: #{reverse.1} parent=8 // pred_fallthru
          _
      $region9: #{reverse.1} parent=4 // pred_fallthru
        _
      // Predicated region
      $region10: #{reverse.1} parent=4 // pred_check
        _
      $region11: #{reverse.1} parent=4 // pred_check_branch
        %8 = sbr.rel target = $region13
      $region12: #{reverse.1} parent=4 // pred_region
        %s10 = ssub.s32 256, 1
        loop: start=0, step=1, limit=1
        $region14: #{reverse.1} parent=12 // loop_pre_header
          _
        $region15: #{reverse.1} parent=12 // loop_header
          %s12 = sphi 0, %s16
          %p13 = scmp.ge.s32.totalorder %s12, 1
          %s17 = sphi %s0, %s0
          %s18 = sphi %s2, %s2
        $region16: #{reverse.1} parent=12 // loop_header_branch
          %15 = sbr.rel (%p13) target = $region20
        $region17: #{reverse.1} parent=12 // loop_body
          %v19 = vld [vmem:[%s17] sm:%s10]
          %20 = vst [vmem:[%s18] sm:%s10] %v19
          %v21 = vld [vmem:[%s17 + $0x8] sm:%s10]
          %22 = vst [vmem:[%s18 + $0x10] sm:%s10] %v21
          %v23 = vld [vmem:[%s17 + $0x10] sm:%s10]
          %24 = vst [vmem:[%s18 + $0x20] sm:%s10] %v23
          %v25 = vld [vmem:[%s17 + $0x18] sm:%s10]
          %26 = vst [vmem:[%s18 + $0x30] sm:%s10] %v25
          %v27 = vld [vmem:[%s17 + $0x20] sm:%s10]
          %28 = vst [vmem:[%s18 + $0x40] sm:%s10] %v27
          %v29 = vld [vmem:[%s17 + $0x28] sm:%s10]
          %30 = vst [vmem:[%s18 + $0x50] sm:%s10] %v29
          %v31 = vld [vmem:[%s17 + $0x30] sm:%s10]
          %32 = vst [vmem:[%s18 + $0x60] sm:%s10] %v31
          %v33 = vld [vmem:[%s17 + $0x38] sm:%s10]
          %34 = vst [vmem:[%s18 + $0x70] sm:%s10] %v33
        $region18: #{reverse.1} parent=12 // loop_footer
          %s16 = sadd.s32 1, %s12
        $region19: #{reverse.1} parent=12 // loop_footer_branch
          %11 = sbr.rel target = $region15
        $region20: #{reverse.1} parent=12 // loop_exit
          _
      $region13: #{reverse.1} parent=4 // pred_fallthru
        _
    $region5: #{reverse.1} parent=1 // pred_fallthru
      _
    %63 = vnop
    %s64 = scalar_lea.vmem [#allocation0], 7
    %v65 = vld [vmem:[%s64] ss:$-1 sm:$0xff]
    %v66 = vrot.slane %v65, 1
    %67 = vst [vmem:[#allocation1] sm:$0xff] %v66
    %s68 = scalar_lea.vmem [#allocation0], 8
    %s69 = scalar_lea.vmem %s68, 7 [#allocation0]
    %v70 = vld [vmem:[%s69] ss:$-1 sm:$0xff]
    %v71 = vrot.slane %v70, 1
    %v72 = vlaneseq
    %v73 = vshrl.u32 %v72, 7
    %vm74 = vcmp.lt.s32.totalorder %v73, 7
    %75 = vst.msk [vmem:[#allocation1] sm:$0xff] %vm74, %v71
    %s76 = scalar_lea.vmem [#allocation1], 8
    %s77 = scalar_lea.vmem [#allocation0], 16
    %s78 = scalar_lea.vmem %s77, 7 [#allocation0]
    %v79 = vld [vmem:[%s78] ss:$-1 sm:$0xff]
    %v80 = vrot.slane %v79, 1
    %81 = vst [vmem:[%s76] sm:$0xff] %v80
    %s82 = scalar_lea.vmem %s77, 8 [#allocation0]
    %s83 = scalar_lea.vmem %s82, 7 [#allocation0]
    %v84 = vld [vmem:[%s83] ss:$-1 sm:$0xff]
    %v85 = vrot.slane %v84, 1
    %v86 = vlaneseq
    %v87 = vshrl.u32 %v86, 7
    %vm88 = vcmp.lt.s32.totalorder %v87, 7
    %89 = vst.msk [vmem:[%s76] sm:$0xff] %vm88, %v85
    %s90 = scalar_lea.vmem [#allocation1], 16
    %s91 = scalar_lea.vmem [#allocation0], 32
    %s92 = scalar_lea.vmem %s91, 7 [#allocation0]
    %v93 = vld [vmem:[%s92] ss:$-1 sm:$0xff]
    %v94 = vrot.slane %v93, 1
    %95 = vst [vmem:[%s90] sm:$0xff] %v94
    %s96 = scalar_lea.vmem %s91, 8 [#allocation0]
    %s97 = scalar_lea.vmem %s96, 7 [#allocation0]
    %v98 = vld [vmem:[%s97] ss:$-1 sm:$0xff]
    %v99 = vrot.slane %v98, 1
    %v100 = vlaneseq
    %v101 = vshrl.u32 %v100, 7
    %vm102 = vcmp.lt.s32.totalorder %v101, 7
    %103 = vst.msk [vmem:[%s90] sm:$0xff] %vm102, %v99
    %s104 = scalar_lea.vmem [#allocation1], 24
    %s105 = scalar_lea.vmem [#allocation0], 48
    %s106 = scalar_lea.vmem %s105, 7 [#allocation0]
    %v107 = vld [vmem:[%s106] ss:$-1 sm:$0xff]
    %v108 = vrot.slane %v107, 1
    %109 = vst [vmem:[%s104] sm:$0xff] %v108
    %s110 = scalar_lea.vmem %s105, 8 [#allocation0]
    %s111 = scalar_lea.vmem %s110, 7 [#allocation0]
    %v112 = vld [vmem:[%s111] ss:$-1 sm:$0xff]
    %v113 = vrot.slane %v112, 1
    %v114 = vlaneseq
    %v115 = vshrl.u32 %v114, 7
    %vm116 = vcmp.lt.s32.totalorder %v115, 7
    %117 = vst.msk [vmem:[%s104] sm:$0xff] %vm116, %v113
    %s118 = scalar_lea.vmem [#allocation1], 32
    %s119 = scalar_lea.vmem [#allocation0], 64
    %s120 = scalar_lea.vmem %s119, 7 [#allocation0]
    %v121 = vld [vmem:[%s120] ss:$-1 sm:$0xff]
    %v122 = vrot.slane %v121, 1
    %123 = vst [vmem:[%s118] sm:$0xff] %v122
    %s124 = scalar_lea.vmem %s119, 8 [#allocation0]
    %s125 = scalar_lea.vmem %s124, 7 [#allocation0]
    %v126 = vld [vmem:[%s125] ss:$-1 sm:$0xff]
    %v127 = vrot.slane %v126, 1
    %v128 = vlaneseq
    %v129 = vshrl.u32 %v128, 7
    %vm130 = vcmp.lt.s32.totalorder %v129, 7
    %131 = vst.msk [vmem:[%s118] sm:$0xff] %vm130, %v127
    %s132 = scalar_lea.vmem [#allocation1], 40
    %s133 = scalar_lea.vmem [#allocation0], 80
    %s134 = scalar_lea.vmem %s133, 7 [#allocation0]
    %v135 = vld [vmem:[%s134] ss:$-1 sm:$0xff]
    %v136 = vrot.slane %v135, 1
    %137 = vst [vmem:[%s132] sm:$0xff] %v136
    %s138 = scalar_lea.vmem %s133, 8 [#allocation0]
    %s139 = scalar_lea.vmem %s138, 7 [#allocation0]
    %v140 = vld [vmem:[%s139] ss:$-1 sm:$0xff]
    %v141 = vrot.slane %v140, 1
    %v142 = vlaneseq
    %v143 = vshrl.u32 %v142, 7
    %vm144 = vcmp.lt.s32.totalorder %v143, 7
    %145 = vst.msk [vmem:[%s132] sm:$0xff] %vm144, %v141
    %s146 = scalar_lea.vmem [#allocation1], 48
    %s147 = scalar_lea.vmem [#allocation0], 96
    %s148 = scalar_lea.vmem %s147, 7 [#allocation0]
    %v149 = vld [vmem:[%s148] ss:$-1 sm:$0xff]
    %v150 = vrot.slane %v149, 1
    %151 = vst [vmem:[%s146] sm:$0xff] %v150
    %s152 = scalar_lea.vmem %s147, 8 [#allocation0]
    %s153 = scalar_lea.vmem %s152, 7 [#allocation0]
    %v154 = vld [vmem:[%s153] ss:$-1 sm:$0xff]
    %v155 = vrot.slane %v154, 1
    %v156 = vlaneseq
    %v157 = vshrl.u32 %v156, 7
    %vm158 = vcmp.lt.s32.totalorder %v157, 7
    %159 = vst.msk [vmem:[%s146] sm:$0xff] %vm158, %v155
    %s160 = scalar_lea.vmem [#allocation1], 56
    %s161 = scalar_lea.vmem [#allocation0], 112
    %s162 = scalar_lea.vmem %s161, 7 [#allocation0]
    %v163 = vld [vmem:[%s162] ss:$-1 sm:$0xff]
    %v164 = vrot.slane %v163, 1
    %165 = vst [vmem:[%s160] sm:$0xff] %v164
    %s166 = scalar_lea.vmem %s161, 8 [#allocation0]
    %s167 = scalar_lea.vmem %s166, 7 [#allocation0]
    %v168 = vld [vmem:[%s167] ss:$-1 sm:$0xff]
    %v169 = vrot.slane %v168, 1
    %v170 = vlaneseq
    %v171 = vshrl.u32 %v170, 7
    %vm172 = vcmp.lt.s32.totalorder %v171, 7
    %173 = vst.msk [vmem:[%s160] sm:$0xff] %vm172, %v169
    // Predicated region
    $region36: #{reverse.1} parent=1 // pred_check
      _
    $region37: #{reverse.1} parent=1 // pred_check_branch
      %175 = sbr.rel (0) target = $region39
    $region38: #{reverse.1} parent=1 // pred_region
      // Predicated region
      $region40: #{reverse.1} parent=38 // pred_check
        _
      $region41: #{reverse.1} parent=38 // pred_check_branch
        %177 = sbr.rel (0) target = $region43
      $region42: #{reverse.1} parent=38 // pred_region
        // Predicated region
        $region55: #{reverse.1} parent=42 // pred_check
          _
        $region56: #{reverse.1} parent=42 // pred_check_branch
          %207 = sbr.rel (0) target = $region58
        $region57: #{reverse.1} parent=42 // pred_region
          loop: start=0, step=1, limit=1
          $region59: #{reverse.1} parent=57 // loop_pre_header
            _
          $region60: #{reverse.1} parent=57 // loop_header
            %s209 = sphi 0, %s213
            %p210 = scmp.ge.s32.totalorder %s209, 1
            %s214 = sphi [#allocation1], [#allocation1]
            %s215 = sphi %s1, %s1
          $region61: #{reverse.1} parent=57 // loop_header_branch
            %212 = sbr.rel (%p210) target = $region65
          $region62: #{reverse.1} parent=57 // loop_body
            %v216 = vld [vmem:[%s214] sm:$0xff]
            %217 = vst [vmem:[%s215] sm:$0xff] %v216
            %v218 = vld [vmem:[%s214 + $0x8] sm:$0xff]
            %219 = vst [vmem:[%s215 + $0x8] sm:$0xff] %v218
            %v220 = vld [vmem:[%s214 + $0x10] sm:$0xff]
            %221 = vst [vmem:[%s215 + $0x10] sm:$0xff] %v220
            %v222 = vld [vmem:[%s214 + $0x18] sm:$0xff]
            %223 = vst [vmem:[%s215 + $0x18] sm:$0xff] %v222
            %v224 = vld [vmem:[%s214 + $0x20] sm:$0xff]
            %225 = vst [vmem:[%s215 + $0x20] sm:$0xff] %v224
            %v226 = vld [vmem:[%s214 + $0x28] sm:$0xff]
            %227 = vst [vmem:[%s215 + $0x28] sm:$0xff] %v226
            %v228 = vld [vmem:[%s214 + $0x30] sm:$0xff]
            %229 = vst [vmem:[%s215 + $0x30] sm:$0xff] %v228
            %v230 = vld [vmem:[%s214 + $0x38] sm:$0xff]
            %231 = vst [vmem:[%s215 + $0x38] sm:$0xff] %v230
          $region63: #{reverse.1} parent=57 // loop_footer
            %s213 = sadd.s32 1, %s209
          $region64: #{reverse.1} parent=57 // loop_footer_branch
            %208 = sbr.rel target = $region60
          $region65: #{reverse.1} parent=57 // loop_exit
            _
        $region58: #{reverse.1} parent=42 // pred_fallthru
          _
        // Predicated region
        $region66: #{reverse.1} parent=42 // pred_check
          _
        $region67: #{reverse.1} parent=42 // pred_check_branch
          %233 = sbr.rel target = $region69
        $region68: #{reverse.1} parent=42 // pred_region
          _
        $region69: #{reverse.1} parent=42 // pred_fallthru
          _
      $region43: #{reverse.1} parent=38 // pred_fallthru
        _
      // Predicated region
      $region44: #{reverse.1} parent=38 // pred_check
        _
      $region45: #{reverse.1} parent=38 // pred_check_branch
        %179 = sbr.rel target = $region47
      $region46: #{reverse.1} parent=38 // pred_region
        %s181 = ssub.s32 256, 1
        loop: start=0, step=1, limit=1
        $region48: #{reverse.1} parent=46 // loop_pre_header
          _
        $region49: #{reverse.1} parent=46 // loop_header
          %s183 = sphi 0, %s187
          %p184 = scmp.ge.s32.totalorder %s183, 1
          %s188 = sphi [#allocation1], [#allocation1]
          %s189 = sphi %s1, %s1
        $region50: #{reverse.1} parent=46 // loop_header_branch
          %186 = sbr.rel (%p184) target = $region54
        $region51: #{reverse.1} parent=46 // loop_body
          %v190 = vld [vmem:[%s188] sm:%s181]
          %191 = vst [vmem:[%s189] sm:%s181] %v190
          %v192 = vld [vmem:[%s188 + $0x8] sm:%s181]
          %193 = vst [vmem:[%s189 + $0x8] sm:%s181] %v192
          %v194 = vld [vmem:[%s188 + $0x10] sm:%s181]
          %195 = vst [vmem:[%s189 + $0x10] sm:%s181] %v194
          %v196 = vld [vmem:[%s188 + $0x18] sm:%s181]
          %197 = vst [vmem:[%s189 + $0x18] sm:%s181] %v196
          %v198 = vld [vmem:[%s188 + $0x20] sm:%s181]
          %199 = vst [vmem:[%s189 + $0x20] sm:%s181] %v198
          %v200 = vld [vmem:[%s188 + $0x28] sm:%s181]
          %201 = vst [vmem:[%s189 + $0x28] sm:%s181] %v200
          %v202 = vld [vmem:[%s188 + $0x30] sm:%s181]
          %203 = vst [vmem:[%s189 + $0x30] sm:%s181] %v202
          %v204 = vld [vmem:[%s188 + $0x38] sm:%s181]
          %205 = vst [vmem:[%s189 + $0x38] sm:%s181] %v204
        $region52: #{reverse.1} parent=46 // loop_footer
          %s187 = sadd.s32 1, %s183
        $region53: #{reverse.1} parent=46 // loop_footer_branch
          %182 = sbr.rel target = $region49
        $region54: #{reverse.1} parent=46 // loop_exit
          _
      $region47: #{reverse.1} parent=38 // pred_fallthru
        _
    $region39: #{reverse.1} parent=1 // pred_fallthru
      _
    %234 = vnop

</llo_original>
